<compile_context>
chip_gen: v7x
topology: tpu7x:2x2x1
jax: 0.10.0
libtpu: 0.0.40
codegen_flags: <defaults>
</compile_context>

<pallas_src>
import jax
import jax.numpy as jnp
from jax.experimental import pallas as pl
from jax.experimental.pallas import tpu as pltpu


def _round_up(a, m):
    return ((a + m - 1) // m) * m


def _vmem_cap_bytes():
    """Physical VMEM capacity; conservative 64 MiB fallback (v7x per-TC)."""
    try:
        info = pltpu.get_tpu_info()
        cap = getattr(info, "vmem_capacity_bytes", None)
        if cap:
            return int(cap)
    except Exception:
        pass
    return 64 * 1024 * 1024


def _choose_ff_tile(d_ff, ff_tile):
    """Largest multiple of 128 <= ff_tile that divides d_ff (else d_ff)."""
    if ff_tile is None or ff_tile >= d_ff:
        return d_ff
    t = (ff_tile // 128) * 128
    while t >= 128:
        if d_ff % t == 0:
            return t
        t -= 128
    return d_ff


def _vmem_limit(need_bytes):
    cap = _vmem_cap_bytes()
    limit = int(need_bytes * 1.5) + (16 << 20)
    limit = max(limit, 48 << 20)
    limit = min(limit, cap - (8 << 20))
    return limit


# ---------------------------------------------------------------------------
# Gated MMoE kernel (bmmoe=True, n_e > 1).
# grid = (row_tiles, n_e, ff_tiles); expert & ff axes are accumulation axes.
# ---------------------------------------------------------------------------
def mmoe_kernel(flags_ref, bseq_ref, gw_ref, x_ref, w1_ref, b1_ref, w2_ref,
                b2_ref, o_ref, gate_sc, acc_sc):
    i = pl.program_id(0)
    e = pl.program_id(1)
    f = pl.program_id(2)
    n_f = pl.num_programs(2)
    n_e = gate_sc.shape[0]
    n_b = gw_ref.shape[-1] // n_e

    active = flags_ref[i] != 0
    first = jnp.logical_and(e == 0, f == 0)

    @pl.when(first)
    def _init():
        acc_sc[...] = jnp.zeros_like(acc_sc)

    # Once per row tile: combined gate g[r, :] = softmax(x[r] @ w_gates[b_seq[r]-1]),
    # zero when b_seq[r] == 0.  Single fused gating matmul over all tasks; the
    # per-expert columns are extracted once here and stored as (n_e, tr, 1).
    @pl.when(jnp.logical_and(first, active))
    def _gates():
        x = x_ref[...]                                            # (TR, D) bf16
        logits_all = jnp.dot(x, gw_ref[...],
                             preferred_element_type=jnp.float32)  # (TR, n_b*n_e)
        tsel = bseq_ref[...]                                      # (TR, 1) int32
        gate = jnp.zeros((x.shape[0], n_e), jnp.float32)
        for t in range(n_b):                                      # n_b small & static
            lg = logits_all[:, t * n_e:(t + 1) * n_e]
            m = jnp.max(lg, axis=-1, keepdims=True)
            p = jnp.exp(lg - m)
            sm = p / jnp.sum(p, axis=-1, keepdims=True)
            gate = gate + jnp.where(tsel == (t + 1), sm, 0.0)
        col = jax.lax.broadcasted_iota(jnp.int32, gate.shape, 1)
        for ei in range(n_e):                                     # unrolled, init-only
            gate_sc[ei] = jnp.sum(jnp.where(col == ei, gate, 0.0),
                                  axis=1, keepdims=True)          # (TR, 1)

    # Expert-e FFN chunk over d_ff columns f (f32 accumulation).
    @pl.when(active)
    def _expert():
        x = x_ref[...]                                            # (TR, D) bf16
        h = jnp.dot(x, w1_ref[0],
                    preferred_element_type=jnp.float32) + b1_ref[0]
        h = jnp.maximum(h, 0.0)                                   # ReLU (elementwise,
        # TODO(synk): dropout omitted (inference identity); training-mode dropout
        # would use pltpu.prng_seed + pltpu.prng_random_bits for the mask.
        y = jnp.dot(h.astype(w2_ref.dtype), w2_ref[0],
                    preferred_element_type=jnp.float32)           # (TR, D) f32
        y = y + jnp.where(f == 0, b2_ref[0], 0.0)                 # bias added once
        acc_sc[...] += gate_sc[e] * y

    @pl.when(jnp.logical_and(e == n_e - 1, f == n_f - 1))
    def _finalize():
        o_ref[...] = acc_sc[...].astype(o_ref.dtype)


def mmoe_gated_forward(x, b_seq, w1s, b1s, w2s, b2s, w_gates, *,
                       row_tile=512, ff_tile=2048,
                       compute_dtype=jnp.bfloat16, vmem_limit_bytes=None):
    """Gated MMoE forward (bmmoe=True, n_e > 1), inference mode.

    x:       (B, N, d_model)
    b_seq:   (B, N) int in [0, n_b]    (0 selects the all-zeros output)
    w1s:     (n_e, d_model, d_ff)      pre-transposed torch Linear weights
    b1s:     (n_e, d_ff)
    w2s:     (n_e, d_ff, d_model)
    b2s:     (n_e, d_model)
    w_gates: (n_b, d_model, n_e)
    """
    B, N, d_model = x.shape
    n_e, _, d_ff = w1s.shape
    n_b = w_gates.shape[0]

    rows = B * N
    tr = _round_up(min(row_tile, _round_up(rows, 16)), 16)
    # v7x has 2 TensorCores: prefer >= 2 row tiles so the parallel row axis shards.
    if rows > 16 and _round_up(rows, tr) // tr < 2:
        tr = _round_up(-(-rows // 2), 16)
    rows_p = _round_up(rows, tr)
    num_tiles = rows_p // tr

    tff = _choose_ff_tile(d_ff, ff_tile)
    n_f = d_ff // tff

    cd = compute_dtype
    cd_b = jnp.dtype(cd).itemsize
    out_b = jnp.dtype(x.dtype).itemsize

    x2d = x.reshape(rows, d_model)
    bseq2d = b_seq.reshape(rows, 1).astype(jnp.int32)
    if rows_p != rows:
        x2d = jnp.pad(x2d, ((0, rows_p - rows), (0, 0)))
        # pad task id with 0 -> padded rows produce zeros (and are sliced off)
        bseq2d = jnp.pad(bseq2d, ((0, rows_p - rows), (0, 0)))
    x2d = x2d.astype(cd)

    # fused gating weights: (d_model, n_b * n_e), task-major column blocks
    gw_cat = jnp.transpose(w_gates, (1, 0, 2)).reshape(d_model, n_b * n_e).astype(cd)

    w1c = w1s.astype(cd)
    w2c = w2s.astype(cd)
    b1r = b1s.reshape(n_e, 1, d_ff).astype(jnp.float32)
    b2r = b2s.reshape(n_e, 1, d_model).astype(jnp.float32)

    # per-row-tile "any active row" flag (scalar prefetch -> SMEM)
    flags = jnp.any((bseq2d != 0).reshape(num_tiles, tr), axis=1).astype(jnp.int32)

    grid = (num_tiles, n_e, n_f)

    # VMEM footprint estimate (single buffer), used to derive vmem_limit_bytes.
    in_blocks = (tr * d_model * cd_b                       # x
                 + tr * 128 * 4                            # b_seq (lane padded)
                 + d_model * _round_up(n_b * n_e, 128) * cd_b   # gate weights
                 + (d_model + 8) * tff * cd_b              # w1 + b1 chunk
                 + (tff + 8) * d_model * cd_b              # w2 chunk
                 + 128 * d_model * 4)                      # b2
    scratch = (n_e * tr * 128 * 4                          # gate_sc (lane padded)
               + tr * d_model * 4                          # acc_sc
               + tr * tff * 4)                             # h intermediate
    need = 2 * in_blocks + 2 * tr * d_model * out_b + scratch
    if vmem_limit_bytes is None:
        vmem_limit_bytes = _vmem_limit(need)

    # Honest bytes_accessed: expert weights re-streamed once per row tile.
    w_bytes = (w1c.size + w2c.size) * cd_b
    bytes_accessed = (x2d.size * cd_b + bseq2d.size * 4 + flags.size * 4
                      + num_tiles * (w_bytes + gw_cat.size * cd_b
                                     + (b1r.size + b2r.size) * 4)
                      + rows_p * d_model * out_b)
    flops = (4 * rows_p * d_model * d_ff * n_e             # two matmuls per expert
             + 2 * rows_p * d_model * n_b * n_e)           # fused gating matmul
    transcendentals = rows_p * n_b * n_e                   # softmax exps

    # TODO(synk): on v6e (128 MiB VMEM) sweep pipeline_mode=pl.Buffered(3) on the
    # w1/w2 BlockSpecs if a profile shows exposed weight DMA at expert boundaries.
    out2d = pl.pallas_call(
        mmoe_kernel,
        out_shape=jax.ShapeDtypeStruct((rows_p, d_model), x.dtype),
        grid_spec=pltpu.PrefetchScalarGridSpec(
            num_scalar_prefetch=1,
            grid=grid,
            in_specs=[
                pl.BlockSpec((tr, 1), lambda i, e, f, fl: (i, 0)),               # b_seq
                pl.BlockSpec((d_model, n_b * n_e), lambda i, e, f, fl: (0, 0)),  # gates W
                pl.BlockSpec((tr, d_model), lambda i, e, f, fl: (i, 0)),         # x
                pl.BlockSpec((1, d_model, tff), lambda i, e, f, fl: (e, 0, f)),  # w1[e] chunk
                pl.BlockSpec((1, 1, tff), lambda i, e, f, fl: (e, 0, f)),        # b1[e] chunk
                pl.BlockSpec((1, tff, d_model), lambda i, e, f, fl: (e, f, 0)),  # w2[e] chunk
                pl.BlockSpec((1, 1, d_model), lambda i, e, f, fl: (e, 0, 0)),    # b2[e]
            ],
            out_specs=pl.BlockSpec((tr, d_model), lambda i, e, f, fl: (i, 0)),
            scratch_shapes=[
                pltpu.VMEM((n_e, tr, 1), jnp.float32),      # per-expert gate columns
                pltpu.VMEM((tr, d_model), jnp.float32),     # output accumulator
            ],
        ),
        compiler_params=pltpu.CompilerParams(
            dimension_semantics=("parallel", "arbitrary", "arbitrary"),
            vmem_limit_bytes=vmem_limit_bytes,
        ),
        cost_estimate=pl.CostEstimate(
            flops=flops, transcendentals=transcendentals,
            bytes_accessed=bytes_accessed),
    )(flags, bseq2d, gw_cat, x2d, w1c, b1r, w2c, b2r)

    return out2d[:rows].reshape(B, N, d_model)


# ---------------------------------------------------------------------------
# Plain PositionwiseFeedForward kernel (bmmoe=False / n_e == 1 fallback path).
# grid = (row_tiles, ff_tiles); d_ff is an accumulation axis.
# ---------------------------------------------------------------------------
def ffn_kernel(x_ref, w1_ref, b1_ref, w2_ref, b2_ref, o_ref, acc_sc):
    f = pl.program_id(1)
    n_f = pl.num_programs(1)

    @pl.when(f == 0)
    def _init():
        acc_sc[...] = jnp.zeros_like(acc_sc)

    h = jnp.dot(x_ref[...], w1_ref[...],
                preferred_element_type=jnp.float32) + b1_ref[...]
    h = jnp.maximum(h, 0.0)
    # TODO(synk): dropout omitted (inference identity).
    acc_sc[...] += jnp.dot(h.astype(w2_ref.dtype), w2_ref[...],
                           preferred_element_type=jnp.float32)

    @pl.when(f == n_f - 1)
    def _finalize():
        o_ref[...] = (acc_sc[...] + b2_ref[...]).astype(o_ref.dtype)


def positionwise_feed_forward(x, w1, b1, w2, b2, *, row_tile=512, ff_tile=2048,
                              compute_dtype=jnp.bfloat16, vmem_limit_bytes=None):
    """x: (B, N, d_model). w1: (d_model, d_ff), w2: (d_ff, d_model)."""
    B, N, d_model = x.shape
    d_ff = w1.shape[1]
    rows = B * N

    tr = _round_up(min(row_tile, _round_up(rows, 16)), 16)
    if rows > 16 and _round_up(rows, tr) // tr < 2:
        tr = _round_up(-(-rows // 2), 16)
    rows_p = _round_up(rows, tr)
    num_tiles = rows_p // tr

    tff = _choose_ff_tile(d_ff, ff_tile)
    n_f = d_ff // tff

    cd = compute_dtype
    cd_b = jnp.dtype(cd).itemsize
    out_b = jnp.dtype(x.dtype).itemsize

    x2d = x.reshape(rows, d_model)
    if rows_p != rows:
        x2d = jnp.pad(x2d, ((0, rows_p - rows), (0, 0)))
    x2d = x2d.astype(cd)
    w1c = w1.astype(cd)
    w2c = w2.astype(cd)
    b1r = b1.reshape(1, d_ff).astype(jnp.float32)
    b2r = b2.reshape(1, d_model).astype(jnp.float32)

    in_blocks = (tr * d_model * cd_b + (d_model + 8) * tff * cd_b
                 + (tff + 8) * d_model * cd_b + 8 * d_model * 4)
    need = 2 * in_blocks + 2 * tr * d_model * out_b + tr * d_model * 4 + tr * tff * 4
    if vmem_limit_bytes is None:
        vmem_limit_bytes = _vmem_limit(need)

    bytes_accessed = (x2d.size * cd_b
                      + num_tiles * ((w1c.size + w2c.size) * cd_b
                                     + (b1r.size + b2r.size) * 4)
                      + rows_p * d_model * out_b)

    out2d = pl.pallas_call(
        ffn_kernel,
        out_shape=jax.ShapeDtypeStruct((rows_p, d_model), x.dtype),
        grid_spec=pltpu.PrefetchScalarGridSpec(
            num_scalar_prefetch=0,
            grid=(num_tiles, n_f),
            in_specs=[
                pl.BlockSpec((tr, d_model), lambda i, f: (i, 0)),
                pl.BlockSpec((d_model, tff), lambda i, f: (0, f)),
                pl.BlockSpec((1, tff), lambda i, f: (0, f)),
                pl.BlockSpec((tff, d_model), lambda i, f: (f, 0)),
                pl.BlockSpec((1, d_model), lambda i, f: (0, 0)),
            ],
            out_specs=pl.BlockSpec((tr, d_model), lambda i, f: (i, 0)),
            scratch_shapes=[pltpu.VMEM((tr, d_model), jnp.float32)],
        ),
        compiler_params=pltpu.CompilerParams(
            dimension_semantics=("parallel", "arbitrary"),
            vmem_limit_bytes=vmem_limit_bytes,
        ),
        cost_estimate=pl.CostEstimate(
            flops=4 * rows_p * d_model * d_ff,
            transcendentals=0,
            bytes_accessed=bytes_accessed),
    )(x2d, w1c, b1r, w2c, b2r)

    return out2d[:rows].reshape(B, N, d_model)


def mmoe_forward(x, b_seq, w1s, b1s, w2s, b2s, w_gates=None, *, bmmoe=False,
                 row_tile=512, ff_tile=2048, compute_dtype=jnp.bfloat16):
    """Dispatcher mirroring MMoE.forward."""
    n_e = w1s.shape[0]
    if bmmoe and n_e > 1:
        return mmoe_gated_forward(x, b_seq, w1s, b1s, w2s, b2s, w_gates,
                                  row_tile=row_tile, ff_tile=ff_tile,
                                  compute_dtype=compute_dtype)
    return positionwise_feed_forward(x, w1s[0], b1s[0], w2s[0], b2s[0],
                                     row_tile=row_tile, ff_tile=ff_tile,
                                     compute_dtype=compute_dtype)


if __name__ == "__main__":
    # Small shapes: batch=2, seq=8, d_model=128 (lane-dense), d_ff=256,
    # n_e=3 experts, n_b=2 tasks (b_seq values in [0, n_b]).
    B, N, d_model, d_ff = 2, 8, 128, 256
    n_e, n_b = 3, 2

    key = jax.random.PRNGKey(0)
    kx, kb, kg, kw1, kw2 = jax.random.split(key, 5)

    x = jax.random.normal(kx, (B, N, d_model), dtype=jnp.float32)
    b_seq = jax.random.randint(kb, (B, N), 0, n_b + 1)       # in [0, n_b]

    # _init_weights: normal(0, 0.02) Linear weights, zero biases (pre-transposed).
    w1s = 0.02 * jax.random.normal(kw1, (n_e, d_model, d_ff), dtype=jnp.float32)
    b1s = jnp.zeros((n_e, d_ff), dtype=jnp.float32)
    w2s = 0.02 * jax.random.normal(kw2, (n_e, d_ff, d_model), dtype=jnp.float32)
    b2s = jnp.zeros((n_e, d_model), dtype=jnp.float32)
    w_gates = jax.random.normal(kg, (n_b, d_model, n_e), dtype=jnp.float32)

    # ---- gated MMoE path (bmmoe=True, n_e > 1) ----
    out = mmoe_forward(x, b_seq, w1s, b1s, w2s, b2s, w_gates, bmmoe=True)
    out = jax.block_until_ready(out)

    with jax.default_matmul_precision("highest"):
        experts_o = jnp.stack([
            jnp.maximum(x @ w1s[e] + b1s[e], 0.0) @ w2s[e] + b2s[e]
            for e in range(n_e)])                                     # (E,B,N,D)
        gates_o = jax.nn.softmax(
            jnp.einsum("bnd,tde->tbne", x, w_gates), axis=-1)         # (T,B,N,E)
        gated = jnp.einsum("ebnd,tbne->tbnd", experts_o, gates_o)     # (T,B,N,D)
        outputs = jnp.concatenate([jnp.zeros_like(x)[None], gated], axis=0)
        onehot = jax.nn.one_hot(b_seq, n_b + 1, dtype=x.dtype)        # (B,N,T+1)
        ref = jnp.einsum("tbnd,bnt->bnd", outputs, onehot)

    assert out.shape == (B, N, d_model)
    # bf16 MXU inputs (f32 accumulation) -> relaxed tolerance vs f32 reference.
    assert jnp.allclose(out, ref, atol=2e-2, rtol=2e-2), \
        float(jnp.max(jnp.abs(out - ref)))

    # ---- fallback path (bmmoe=False): single PositionwiseFeedForward ----
    out_pff = mmoe_forward(x, b_seq, w1s, b1s, w2s, b2s, bmmoe=False)
    out_pff = jax.block_until_ready(out_pff)
    with jax.default_matmul_precision("highest"):
        ref_pff = jnp.maximum(x @ w1s[0] + b1s[0], 0.0) @ w2s[0] + b2s[0]
    assert jnp.allclose(out_pff, ref_pff, atol=1e-2, rtol=1e-2), \
        float(jnp.max(jnp.abs(out_pff - ref_pff)))

    print("KERNEL_OK")
</pallas_src>

<mosaic_0001>
module attributes {stable_mosaic.version = 11 : i64} {
  func.func @mmoe_kernel(%arg0: i32, %arg1: i32, %arg2: i32, %arg3: memref<1xi32, #tpu.memory_space<smem>>, %arg4: memref<16x1xi32, #tpu.memory_space<vmem>>, %arg5: memref<128x6xbf16, #tpu.memory_space<vmem>>, %arg6: memref<16x128xbf16, #tpu.memory_space<vmem>>, %arg7: memref<1x128x256xbf16, #tpu.memory_space<vmem>>, %arg8: memref<1x1x256xf32, #tpu.memory_space<vmem>>, %arg9: memref<1x256x128xbf16, #tpu.memory_space<vmem>>, %arg10: memref<1x1x128xf32, #tpu.memory_space<vmem>>, %arg11: memref<16x128xf32, #tpu.memory_space<vmem>>, %arg12: memref<3x16x1xf32, #tpu.memory_space<vmem>>, %arg13: memref<16x128xf32, #tpu.memory_space<vmem>>) attributes {dimension_semantics = [#tpu.dimension_semantics<parallel>, #tpu.dimension_semantics<arbitrary>, #tpu.dimension_semantics<arbitrary>], iteration_bounds = array<i64: 1, 3, 1>, scalar_prefetch = 1 : i64, scratch_operands = 2 : i64, tpu.core_type = #tpu.core_type<tc>, window_params = [{transform_indices = @transform_0, window_bounds = array<i64: 16, 1>}, {pipeline_mode = #tpu.pipeline_mode<synchronous>, transform_indices = @transform_1, window_bounds = array<i64: 128, 6>}, {transform_indices = @transform_2, window_bounds = array<i64: 16, 128>}, {transform_indices = @transform_3, window_bounds = array<i64: 1, 128, 256>}, {transform_indices = @transform_4, window_bounds = array<i64: 1, 1, 256>}, {transform_indices = @transform_5, window_bounds = array<i64: 1, 256, 128>}, {transform_indices = @transform_6, window_bounds = array<i64: 1, 1, 128>}, {transform_indices = @transform_7, window_bounds = array<i64: 16, 128>}]} {
    %0 = arith.index_cast %arg0 : i32 to index
    %1 = memref.load %arg3[%0] : memref<1xi32, #tpu.memory_space<smem>>
    %c0_i32 = arith.constant 0 : i32
    %2 = arith.cmpi ne, %1, %c0_i32 : i32
    %c0_i32_0 = arith.constant 0 : i32
    %3 = arith.cmpi eq, %arg1, %c0_i32_0 : i32
    %c0_i32_1 = arith.constant 0 : i32
    %4 = arith.cmpi eq, %arg2, %c0_i32_1 : i32
    %5 = arith.andi %3, %4 : i1
    %6 = arith.extui %5 : i1 to i32
    %c0_i32_2 = arith.constant 0 : i32
    %7 = arith.cmpi ne, %6, %c0_i32_2 : i32
    scf.if %7 {
      %cst = arith.constant 0.000000e+00 : f32
      %18 = vector.broadcast %cst : f32 to vector<16x128xf32>
      %c0 = arith.constant 0 : index
      %c0_7 = arith.constant 0 : index
      %19 = vector.load %arg13[%c0, %c0_7] : memref<16x128xf32, #tpu.memory_space<vmem>>, vector<16x128xf32>
      tpu.vector_store %arg13[%c0, %c0_7], %18 {strides = array<i32>} : memref<16x128xf32, #tpu.memory_space<vmem>>, vector<16x128xf32>,
    } else {
    }
    %8 = arith.andi %5, %2 : i1
    %9 = arith.extui %8 : i1 to i32
    %c0_i32_3 = arith.constant 0 : i32
    %10 = arith.cmpi ne, %9, %c0_i32_3 : i32
    scf.if %10 {
      %c0 = arith.constant 0 : index
      %c0_7 = arith.constant 0 : index
      %18 = vector.load %arg6[%c0, %c0_7] : memref<16x128xbf16, #tpu.memory_space<vmem>>, vector<16x128xbf16>
      %c0_8 = arith.constant 0 : index
      %c0_9 = arith.constant 0 : index
      %19 = vector.load %arg5[%c0_8, %c0_9] : memref<128x6xbf16, #tpu.memory_space<vmem>>, vector<128x6xbf16>
      %cst = arith.constant dense<0.000000e+00> : vector<16x6xf32>
      %20 = tpu.matmul %18, %19, %cst {dimension_numbers = #tpu.dot_dimension_numbers<[1], [0], [0], [1], [0, 0, 1, 1], [], []>} : vector<16x128xbf16>, vector<128x6xbf16>, vector<16x6xf32> -> vector<16x6xf32>
      %c0_10 = arith.constant 0 : index
      %c0_11 = arith.constant 0 : index
      %21 = vector.load %arg4[%c0_10, %c0_11] : memref<16x1xi32, #tpu.memory_space<vmem>>, vector<16x1xi32>
      %cst_12 = arith.constant 0.000000e+00 : f32
      %22 = vector.broadcast %cst_12 : f32 to vector<16x3xf32>
      %23 = vector.extract_strided_slice %20 {offsets = [0, 0], sizes = [16, 3], strides = [1, 1]} : vector<16x6xf32> to vector<16x3xf32>
      %cst_13 = arith.constant dense<0xFF800000> : vector<16xf32>
      %24 = vector.multi_reduction <maximumf>, %23, %cst_13 [1] : vector<16x3xf32> to vector<16xf32>
      %25 = vector.shape_cast %24 : vector<16xf32> to vector<16x1xf32>
      %26 = vector.broadcast %25 : vector<16x1xf32> to vector<16x3xf32>
      %27 = arith.subf %23, %26 : vector<16x3xf32>
      %28 = math.exp %27 : vector<16x3xf32>
      %cst_14 = arith.constant dense<0.000000e+00> : vector<16xf32>
      %29 = vector.multi_reduction <add>, %28, %cst_14 [1] : vector<16x3xf32> to vector<16xf32>
      %30 = vector.shape_cast %29 : vector<16xf32> to vector<16x1xf32>
      %31 = vector.broadcast %30 : vector<16x1xf32> to vector<16x3xf32>
      %32 = arith.divf %28, %31 : vector<16x3xf32>
      %c1_i32 = arith.constant 1 : i32
      %33 = vector.broadcast %c1_i32 : i32 to vector<16x1xi32>
      %34 = arith.cmpi eq, %21, %33 : vector<16x1xi32>
      %cst_15 = arith.constant 0.000000e+00 : f32
      %35 = vector.shape_cast %34 : vector<16x1xi1> to vector<16x1xi1>
      %36 = vector.broadcast %35 : vector<16x1xi1> to vector<16x3xi1>
      %37 = vector.broadcast %cst_15 : f32 to vector<16x3xf32>
      %38 = arith.select %36, %32, %37 : vector<16x3xi1>, vector<16x3xf32>
      %39 = arith.addf %22, %38 : vector<16x3xf32>
      %40 = vector.extract_strided_slice %20 {offsets = [0, 3], sizes = [16, 3], strides = [1, 1]} : vector<16x6xf32> to vector<16x3xf32>
      %cst_16 = arith.constant dense<0xFF800000> : vector<16xf32>
      %41 = vector.multi_reduction <maximumf>, %40, %cst_16 [1] : vector<16x3xf32> to vector<16xf32>
      %42 = vector.shape_cast %41 : vector<16xf32> to vector<16x1xf32>
      %43 = vector.broadcast %42 : vector<16x1xf32> to vector<16x3xf32>
      %44 = arith.subf %40, %43 : vector<16x3xf32>
      %45 = math.exp %44 : vector<16x3xf32>
      %cst_17 = arith.constant dense<0.000000e+00> : vector<16xf32>
      %46 = vector.multi_reduction <add>, %45, %cst_17 [1] : vector<16x3xf32> to vector<16xf32>
      %47 = vector.shape_cast %46 : vector<16xf32> to vector<16x1xf32>
      %48 = vector.broadcast %47 : vector<16x1xf32> to vector<16x3xf32>
      %49 = arith.divf %45, %48 : vector<16x3xf32>
      %c2_i32_18 = arith.constant 2 : i32
      %50 = vector.broadcast %c2_i32_18 : i32 to vector<16x1xi32>
      %51 = arith.cmpi eq, %21, %50 : vector<16x1xi32>
      %cst_19 = arith.constant 0.000000e+00 : f32
      %52 = vector.shape_cast %51 : vector<16x1xi1> to vector<16x1xi1>
      %53 = vector.broadcast %52 : vector<16x1xi1> to vector<16x3xi1>
      %54 = vector.broadcast %cst_19 : f32 to vector<16x3xf32>
      %55 = arith.select %53, %49, %54 : vector<16x3xi1>, vector<16x3xf32>
      %56 = arith.addf %39, %55 : vector<16x3xf32>
      %57 = tpu.iota {dimensions = array<i32: 1>} : vector<16x3xi32>
      %c0_i32_20 = arith.constant 0 : i32
      %58 = vector.broadcast %c0_i32_20 : i32 to vector<16x3xi32>
      %59 = arith.cmpi eq, %57, %58 : vector<16x3xi32>
      %cst_21 = arith.constant 0.000000e+00 : f32
      %60 = vector.broadcast %cst_21 : f32 to vector<16x3xf32>
      %61 = arith.select %59, %56, %60 : vector<16x3xi1>, vector<16x3xf32>
      %cst_22 = arith.constant dense<0.000000e+00> : vector<16xf32>
      %62 = vector.multi_reduction <add>, %61, %cst_22 [1] : vector<16x3xf32> to vector<16xf32>
      %63 = vector.shape_cast %62 : vector<16xf32> to vector<16x1xf32>
      %c0_23 = arith.constant 0 : index
      %c0_24 = arith.constant 0 : index
      %c0_25 = arith.constant 0 : index
      %64 = vector.load %arg12[%c0_23, %c0_24, %c0_25] : memref<3x16x1xf32, #tpu.memory_space<vmem>>, vector<1x16x1xf32>
      %65 = vector.shape_cast %64 : vector<1x16x1xf32> to vector<16x1xf32>
      %66 = vector.shape_cast %63 : vector<16x1xf32> to vector<1x16x1xf32>
      tpu.vector_store %arg12[%c0_23, %c0_24, %c0_25], %66 {strides = array<i32>} : memref<3x16x1xf32, #tpu.memory_space<vmem>>, vector<1x16x1xf32>,
      %c1_i32_26 = arith.constant 1 : i32
      %67 = vector.broadcast %c1_i32_26 : i32 to vector<16x3xi32>
      %68 = arith.cmpi eq, %57, %67 : vector<16x3xi32>
      %cst_27 = arith.constant 0.000000e+00 : f32
      %69 = vector.broadcast %cst_27 : f32 to vector<16x3xf32>
      %70 = arith.select %68, %56, %69 : vector<16x3xi1>, vector<16x3xf32>
      %cst_28 = arith.constant dense<0.000000e+00> : vector<16xf32>
      %71 = vector.multi_reduction <add>, %70, %cst_28 [1] : vector<16x3xf32> to vector<16xf32>
      %72 = vector.shape_cast %71 : vector<16xf32> to vector<16x1xf32>
      %c1 = arith.constant 1 : index
      %c0_29 = arith.constant 0 : index
      %c0_30 = arith.constant 0 : index
      %73 = vector.load %arg12[%c1, %c0_29, %c0_30] : memref<3x16x1xf32, #tpu.memory_space<vmem>>, vector<1x16x1xf32>
      %74 = vector.shape_cast %73 : vector<1x16x1xf32> to vector<16x1xf32>
      %75 = vector.shape_cast %72 : vector<16x1xf32> to vector<1x16x1xf32>
      tpu.vector_store %arg12[%c1, %c0_29, %c0_30], %75 {strides = array<i32>} : memref<3x16x1xf32, #tpu.memory_space<vmem>>, vector<1x16x1xf32>,
      %c2_i32_31 = arith.constant 2 : i32
      %76 = vector.broadcast %c2_i32_31 : i32 to vector<16x3xi32>
      %77 = arith.cmpi eq, %57, %76 : vector<16x3xi32>
      %cst_32 = arith.constant 0.000000e+00 : f32
      %78 = vector.broadcast %cst_32 : f32 to vector<16x3xf32>
      %79 = arith.select %77, %56, %78 : vector<16x3xi1>, vector<16x3xf32>
      %cst_33 = arith.constant dense<0.000000e+00> : vector<16xf32>
      %80 = vector.multi_reduction <add>, %79, %cst_33 [1] : vector<16x3xf32> to vector<16xf32>
      %81 = vector.shape_cast %80 : vector<16xf32> to vector<16x1xf32>
      %c2 = arith.constant 2 : index
      %c0_34 = arith.constant 0 : index
      %c0_35 = arith.constant 0 : index
      %82 = vector.load %arg12[%c2, %c0_34, %c0_35] : memref<3x16x1xf32, #tpu.memory_space<vmem>>, vector<1x16x1xf32>
      %83 = vector.shape_cast %82 : vector<1x16x1xf32> to vector<16x1xf32>
      %84 = vector.shape_cast %81 : vector<16x1xf32> to vector<1x16x1xf32>
      tpu.vector_store %arg12[%c2, %c0_34, %c0_35], %84 {strides = array<i32>} : memref<3x16x1xf32, #tpu.memory_space<vmem>>, vector<1x16x1xf32>,
    } else {
    }
    %11 = arith.extui %2 : i1 to i32
    %c0_i32_4 = arith.constant 0 : i32
    %12 = arith.cmpi ne, %11, %c0_i32_4 : i32
    scf.if %12 {
      %c0 = arith.constant 0 : index
      %c0_7 = arith.constant 0 : index
      %18 = vector.load %arg6[%c0, %c0_7] : memref<16x128xbf16, #tpu.memory_space<vmem>>, vector<16x128xbf16>
      %c0_8 = arith.constant 0 : index
      %c0_9 = arith.constant 0 : index
      %c0_10 = arith.constant 0 : index
      %19 = vector.load %arg7[%c0_8, %c0_9, %c0_10] : memref<1x128x256xbf16, #tpu.memory_space<vmem>>, vector<1x128x256xbf16>
      %20 = vector.shape_cast %19 : vector<1x128x256xbf16> to vector<128x256xbf16>
      %cst = arith.constant dense<0.000000e+00> : vector<16x256xf32>
      %21 = tpu.matmul %18, %20, %cst {dimension_numbers = #tpu.dot_dimension_numbers<[1], [0], [0], [1], [0, 0, 1, 1], [], []>} : vector<16x128xbf16>, vector<128x256xbf16>, vector<16x256xf32> -> vector<16x256xf32>
      %c0_11 = arith.constant 0 : index
      %c0_12 = arith.constant 0 : index
      %c0_13 = arith.constant 0 : index
      %22 = vector.load %arg8[%c0_11, %c0_12, %c0_13] : memref<1x1x256xf32, #tpu.memory_space<vmem>>, vector<1x1x256xf32>
      %23 = vector.shape_cast %22 : vector<1x1x256xf32> to vector<1x256xf32>
      %24 = vector.broadcast %23 : vector<1x256xf32> to vector<16x256xf32>
      %25 = arith.addf %21, %24 : vector<16x256xf32>
      %cst_14 = arith.constant 0.000000e+00 : f32
      %26 = vector.broadcast %cst_14 : f32 to vector<16x256xf32>
      %27 = arith.maximumf %25, %26 : vector<16x256xf32>
      %28 = arith.truncf %27 : vector<16x256xf32> to vector<16x256xbf16>
      %c0_15 = arith.constant 0 : index
      %c0_16 = arith.constant 0 : index
      %c0_17 = arith.constant 0 : index
      %29 = vector.load %arg9[%c0_15, %c0_16, %c0_17] : memref<1x256x128xbf16, #tpu.memory_space<vmem>>, vector<1x256x128xbf16>
      %30 = vector.shape_cast %29 : vector<1x256x128xbf16> to vector<256x128xbf16>
      %cst_18 = arith.constant dense<0.000000e+00> : vector<16x128xf32>
      %31 = tpu.matmul %28, %30, %cst_18 {dimension_numbers = #tpu.dot_dimension_numbers<[1], [0], [0], [1], [0, 0, 1, 1], [], []>} : vector<16x256xbf16>, vector<256x128xbf16>, vector<16x128xf32> -> vector<16x128xf32>
      %c0_i32_19 = arith.constant 0 : i32
      %32 = arith.cmpi eq, %arg2, %c0_i32_19 : i32
      %c0_20 = arith.constant 0 : index
      %c0_21 = arith.constant 0 : index
      %c0_22 = arith.constant 0 : index
      %33 = vector.load %arg10[%c0_20, %c0_21, %c0_22] : memref<1x1x128xf32, #tpu.memory_space<vmem>>, vector<1x1x128xf32>
      %34 = vector.shape_cast %33 : vector<1x1x128xf32> to vector<1x128xf32>
      %cst_23 = arith.constant 0.000000e+00 : f32
      %35 = vector.broadcast %cst_23 : f32 to vector<1x128xf32>
      %36 = arith.select %32, %34, %35 : vector<1x128xf32>
      %37 = vector.broadcast %36 : vector<1x128xf32> to vector<16x128xf32>
      %38 = arith.addf %31, %37 : vector<16x128xf32>
      %c0_24 = arith.constant 0 : index
      %c0_25 = arith.constant 0 : index
      %39 = vector.load %arg13[%c0_24, %c0_25] : memref<16x128xf32, #tpu.memory_space<vmem>>, vector<16x128xf32>
      %40 = arith.index_cast %arg1 : i32 to index
      %c0_26 = arith.constant 0 : index
      %c0_27 = arith.constant 0 : index
      %41 = vector.load %arg12[%40, %c0_26, %c0_27] : memref<3x16x1xf32, #tpu.memory_space<vmem>>, vector<1x16x1xf32>
      %42 = vector.shape_cast %41 : vector<1x16x1xf32> to vector<16x1xf32>
      %43 = vector.broadcast %42 : vector<16x1xf32> to vector<16x128xf32>
      %44 = arith.mulf %43, %38 : vector<16x128xf32>
      %45 = arith.addf %39, %44 : vector<16x128xf32>
      %c0_28 = arith.constant 0 : index
      %c0_29 = arith.constant 0 : index
      %46 = vector.load %arg13[%c0_28, %c0_29] : memref<16x128xf32, #tpu.memory_space<vmem>>, vector<16x128xf32>
      tpu.vector_store %arg13[%c0_28, %c0_29], %45 {strides = array<i32>} : memref<16x128xf32, #tpu.memory_space<vmem>>, vector<16x128xf32>,
    } else {
    }
    %c2_i32 = arith.constant 2 : i32
    %13 = arith.cmpi eq, %arg1, %c2_i32 : i32
    %c0_i32_5 = arith.constant 0 : i32
    %14 = arith.cmpi eq, %arg2, %c0_i32_5 : i32
    %15 = arith.andi %13, %14 : i1
    %16 = arith.extui %15 : i1 to i32
    %c0_i32_6 = arith.constant 0 : i32
    %17 = arith.cmpi ne, %16, %c0_i32_6 : i32
    scf.if %17 {
      %c0 = arith.constant 0 : index
      %c0_7 = arith.constant 0 : index
      %18 = vector.load %arg13[%c0, %c0_7] : memref<16x128xf32, #tpu.memory_space<vmem>>, vector<16x128xf32>
      %c0_8 = arith.constant 0 : index
      %c0_9 = arith.constant 0 : index
      %19 = vector.load %arg11[%c0_8, %c0_9] : memref<16x128xf32, #tpu.memory_space<vmem>>, vector<16x128xf32>
      tpu.vector_store %arg11[%c0_8, %c0_9], %18 {strides = array<i32>} : memref<16x128xf32, #tpu.memory_space<vmem>>, vector<16x128xf32>,
    } else {
    }
    return
  }
  func.func @transform_0(%arg0: i32, %arg1: i32, %arg2: i32, %arg3: memref<1xi32, #tpu.memory_space<smem>>) -> (i32, i32) {
    %c0_i32 = arith.constant 0 : i32
    %c0_i32_0 = arith.constant 0 : i32
    return %arg0, %c0_i32 : i32, i32
  }
  func.func @transform_1(%arg0: i32, %arg1: i32, %arg2: i32, %arg3: memref<1xi32, #tpu.memory_space<smem>>) -> (i32, i32) {
    %c0_i32 = arith.constant 0 : i32
    %c0_i32_0 = arith.constant 0 : i32
    %c0_i32_1 = arith.constant 0 : i32
    return %c0_i32, %c0_i32_0 : i32, i32
  }
  func.func @transform_2(%arg0: i32, %arg1: i32, %arg2: i32, %arg3: memref<1xi32, #tpu.memory_space<smem>>) -> (i32, i32) {
    %c0_i32 = arith.constant 0 : i32
    %c0_i32_0 = arith.constant 0 : i32
    return %arg0, %c0_i32 : i32, i32
  }
  func.func @transform_3(%arg0: i32, %arg1: i32, %arg2: i32, %arg3: memref<1xi32, #tpu.memory_space<smem>>) -> (i32, i32, i32) {
    %c0_i32 = arith.constant 0 : i32
    %c0_i32_0 = arith.constant 0 : i32
    return %arg1, %c0_i32, %arg2 : i32, i32, i32
  }
  func.func @transform_4(%arg0: i32, %arg1: i32, %arg2: i32, %arg3: memref<1xi32, #tpu.memory_space<smem>>) -> (i32, i32, i32) {
    %c0_i32 = arith.constant 0 : i32
    %c0_i32_0 = arith.constant 0 : i32
    return %arg1, %c0_i32, %arg2 : i32, i32, i32
  }
  func.func @transform_5(%arg0: i32, %arg1: i32, %arg2: i32, %arg3: memref<1xi32, #tpu.memory_space<smem>>) -> (i32, i32, i32) {
    %c0_i32 = arith.constant 0 : i32
    %c0_i32_0 = arith.constant 0 : i32
    return %arg1, %arg2, %c0_i32 : i32, i32, i32
  }
  func.func @transform_6(%arg0: i32, %arg1: i32, %arg2: i32, %arg3: memref<1xi32, #tpu.memory_space<smem>>) -> (i32, i32, i32) {
    %c0_i32 = arith.constant 0 : i32
    %c0_i32_0 = arith.constant 0 : i32
    %c0_i32_1 = arith.constant 0 : i32
    return %arg1, %c0_i32, %c0_i32_0 : i32, i32, i32
  }
  func.func @transform_7(%arg0: i32, %arg1: i32, %arg2: i32, %arg3: memref<1xi32, #tpu.memory_space<smem>>) -> (i32, i32) {
    %c0_i32 = arith.constant 0 : i32
    %c0_i32_0 = arith.constant 0 : i32
    return %arg0, %c0_i32 : i32, i32
  }
}

</mosaic_0001>

<llo_original>
// kernel: tpu_custom_call.1
$region0: #{tpu_custom_call.1}
  #allocation0 [shape = 'u32[]', space=smem, size = 0x4, offset = 0x4, fixed_abs, tag = 'smem constant byte address 0x4 - core index']
  #allocation1 [shape = 'u32[144,128]{1,0:T(1,128)}', space=vmem, size = 0x12000, scoped, tag = 'internal scratch']
  #allocation2 [shape = 'f32[3,16,1]{2,1,0:T(8,128)}', space=vmem, size = 0x6000, scoped, tag = 'scratch operand']
  #allocation3 [shape = 'f32[16,128]{1,0:T(8,128)}', space=vmem, size = 0x2000, scoped, tag = 'scratch operand']
  #allocation4 [shape = 's32[1]{0}', space=sflag, size = 0x4, scoped, tag = 'scoped memory for tpu_custom_call.1']
  #allocation5 [shape = 's32[1]{0:T(128)S(6)}', space=smem, size = 0x200, scoped, tag = 'prefetched SMEM operand 0']
  %s0 = inlined_call_operand.<no memory space> [shape: s32[1], index: 0, kind: input, shape index: {}]
  %s1 = inlined_call_operand.vmem [shape: s32[16,1], index: 1, kind: input, shape index: {}]
  %s2 = inlined_call_operand.vmem [shape: bf16[128,6], index: 2, kind: input, shape index: {}]
  %s3 = inlined_call_operand.vmem [shape: bf16[16,128], index: 3, kind: input, shape index: {}]
  %s4 = inlined_call_operand.hbm [shape: bf16[3,128,256], index: 4, kind: input, shape index: {}]
  %s5 = inlined_call_operand.vmem [shape: f32[3,1,256], index: 5, kind: input, shape index: {}]
  %s6 = inlined_call_operand.hbm [shape: bf16[3,256,128], index: 6, kind: input, shape index: {}]
  %s7 = inlined_call_operand.vmem [shape: f32[3,1,128], index: 7, kind: input, shape index: {}]
  %s8 = inlined_call_operand.hbm [shape: f32[16,128], index: 8, kind: output, shape index: {}]
  %s9 = sld [smem:[#allocation0]]
  $region85: #{tpu_custom_call.1} parent=0
    _
  %s11 = ssub.s32 1, %s9
  %s12 = scalar_select 0, %s11, %s9
  %13 = sst [smem:[#allocation5]] %s0
  $region1: #{tpu_custom_call.1} parent=0
    #allocation6 [shape = 'u8[131072]{0}', space=vmem, size = 0x20000, scoped, tag = 'input window, operand 4']
    #allocation7 [shape = 's32[2]{0}', space=sflag, size = 0x8, scoped, tag = 'scoped memory for tpu_custom_call.1']
    #allocation8 [shape = 's32[2]{0}', space=sflag, size = 0x8, scoped, tag = 'scoped memory for tpu_custom_call.1']
    #allocation9 [shape = 'u8[131072]{0}', space=vmem, size = 0x20000, scoped, tag = 'input window, operand 6']
    #allocation10 [shape = 's32[2]{0}', space=sflag, size = 0x8, scoped, tag = 'scoped memory for tpu_custom_call.1']
    #allocation11 [shape = 'u8[8192]{0}', space=vmem, size = 0x2000, scoped, tag = 'output window, operand 0, single buffered']
    %14 = vsyncpa [#allocation7], 0
    %s15 = scalar_lea.sflag [#allocation7], 1
    %16 = vsyncpa %s15, 0
    %17 = vsyncpa [#allocation10], 0
    %s18 = scalar_lea.sflag [#allocation10], 1
    %19 = vsyncpa %s18, 0
    %20 = vsyncpa [#allocation8], 0
    loop: start=0, step=1, limit=5
    $region2: #{tpu_custom_call.1} parent=1 // loop_pre_header
      _
    $region3: #{tpu_custom_call.1} parent=1 // loop_header
      %s22 = sphi 0, %s26
      %p23 = scmp.ge.s32.totalorder %s22, 5
      %s29 = sphi 0, %s48
      %s30 = sphi 0, %s44
      %s31 = sphi 0, %s40
      %s32 = sphi 0, %s29
      %s33 = sphi 0, %s30
      %s34 = sphi 0, %s31
      %s35 = sphi 0, %s32
      %s36 = sphi 0, %s33
      %s37 = sphi 0, %s34
      %s51 = sphi 0, %s53
      %s54 = sphi 0, %s51
      %s55 = sphi 0, %s54
      %s71 = sphi 0, %s55
      %s75 = sphi 0, %s75
      %s77 = sphi 0, %s75
      %s78 = sphi 0, %s77
      %s92 = sphi 0, %s78
      %s98 = sphi 0, %s100
      %s101 = sphi 0, %s98
      %s102 = sphi 0, %s101
      %s118 = sphi 0, %s102
      %s126 = sphi 0, %s128
      %s129 = sphi 0, %s126
      %s130 = sphi 0, %s129
      %s146 = sphi 0, %s130
      %s154 = sphi 0, %s156
      %s157 = sphi 0, %s154
      %s158 = sphi 0, %s157
      %s174 = sphi 0, %s158
      %s182 = sphi 0, %s184
      %s185 = sphi 0, %s182
      %s186 = sphi 0, %s185
      %s202 = sphi 0, %s186
      %s208 = sphi 0, %s210
      %s211 = sphi 0, %s208
      %s212 = sphi 0, %s211
      %s228 = sphi 0, %s212
      %s234 = sphi 0, %s236
      %s237 = sphi 0, %s234
      %s238 = sphi 0, %s237
      %s254 = sphi 0, %s238
    $region4: #{tpu_custom_call.1} parent=1 // loop_header_branch
      %25 = sbr.rel (%p23) target = $region8
    $region5: #{tpu_custom_call.1} parent=1 // loop_body
      %s27 = ssub.s32 %s22, 1
      %s28 = ssub.s32 %s22, 2
      %s38 = sadd.s32 1, %s31
      %p39 = scmp.ge.s32.totalorder %s38, 1
      %s40 = scalar_select %p39, 0, %s38
      %s41 = sadd.s32 1, %s30
      %s42 = scalar_select %p39, %s41, %s30
      %p43 = scmp.ge.s32.totalorder %s42, 3
      %s44 = scalar_select %p43, 0, %s42
      %s45 = sadd.s32 1, %s29
      %s46 = scalar_select %p43, %s45, %s29
      %p47 = scmp.ge.s32.totalorder %s46, 1
      %s48 = scalar_select %p47, 0, %s46
      %s49 = ssub.s32 %s29, %s48
      %p50 = scmp.eq.s32.totalorder %s49, 0
      %s52 = sadd.s32 %s51, 1
      %s53 = scalar_select %p50, %s51, %s52
      %p56 = pneg %p50
      %p57 = scmp.eq.s32.totalorder %s22, 2
      %p58 = por %p56, %p57
      %p59 = scmp.ne.s32.totalorder %s51, %s54
      %p60 = scmp.eq.s32.totalorder %s22, 0
      %p61 = por %p59, %p60
      %p62 = scmp.ne.s32.totalorder %s51, %s54
      %p63 = scmp.eq.s32.totalorder %s27, 2
      %p64 = por %p62, %p63
      %p65 = scmp.ne.s32.totalorder %s54, %s55
      %p66 = scmp.eq.s32.totalorder %s27, 0
      %p67 = por %p65, %p66
      %p68 = scmp.ne.s32.totalorder %s54, %s55
      %p69 = scmp.eq.s32.totalorder %s28, 2
      %p70 = por %p68, %p69
      %p72 = scmp.ne.s32.totalorder %s55, %s71
      %p73 = scmp.eq.s32.totalorder %s28, 0
      %p74 = por %p72, %p73
      %s76 = sadd.s32 %s75, 1
      %p79 = scmp.eq.s32.totalorder %s22, 2
      %p80 = scmp.ne.s32.totalorder %s75, %s77
      %p81 = scmp.eq.s32.totalorder %s22, 0
      %p82 = por %p80, %p81
      %p83 = scmp.ne.s32.totalorder %s75, %s77
      %p84 = scmp.eq.s32.totalorder %s27, 2
      %p85 = por %p83, %p84
      %p86 = scmp.ne.s32.totalorder %s77, %s78
      %p87 = scmp.eq.s32.totalorder %s27, 0
      %p88 = por %p86, %p87
      %p89 = scmp.ne.s32.totalorder %s77, %s78
      %p90 = scmp.eq.s32.totalorder %s28, 2
      %p91 = por %p89, %p90
      %p93 = scmp.ne.s32.totalorder %s78, %s92
      %p94 = scmp.eq.s32.totalorder %s28, 0
      %p95 = por %p93, %p94
      %s96 = ssub.s32 %s29, %s48
      %p97 = scmp.eq.s32.totalorder %s96, 0
      %s99 = sadd.s32 %s98, 1
      %s100 = scalar_select %p97, %s98, %s99
      %p103 = pneg %p97
      %p104 = scmp.eq.s32.totalorder %s22, 2
      %p105 = por %p103, %p104
      %p106 = scmp.ne.s32.totalorder %s98, %s101
      %p107 = scmp.eq.s32.totalorder %s22, 0
      %p108 = por %p106, %p107
      %p109 = scmp.ne.s32.totalorder %s98, %s101
      %p110 = scmp.eq.s32.totalorder %s27, 2
      %p111 = por %p109, %p110
      %p112 = scmp.ne.s32.totalorder %s101, %s102
      %p113 = scmp.eq.s32.totalorder %s27, 0
      %p114 = por %p112, %p113
      %p115 = scmp.ne.s32.totalorder %s101, %s102
      %p116 = scmp.eq.s32.totalorder %s28, 2
      %p117 = por %p115, %p116
      %p119 = scmp.ne.s32.totalorder %s102, %s118
      %p120 = scmp.eq.s32.totalorder %s28, 0
      %p121 = por %p119, %p120
      %s122 = ssub.s32 %s30, %s44
      %s123 = ssub.s32 %s31, %s40
      %s124 = sor.u32 %s122, %s123
      %p125 = scmp.eq.s32.totalorder %s124, 0
      %s127 = sadd.s32 %s126, 1
      %s128 = scalar_select %p125, %s126, %s127
      %p131 = pneg %p125
      %p132 = scmp.eq.s32.totalorder %s22, 2
      %p133 = por %p131, %p132
      %p134 = scmp.ne.s32.totalorder %s126, %s129
      %p135 = scmp.eq.s32.totalorder %s22, 0
      %p136 = por %p134, %p135
      %p137 = scmp.ne.s32.totalorder %s126, %s129
      %p138 = scmp.eq.s32.totalorder %s27, 2
      %p139 = por %p137, %p138
      %p140 = scmp.ne.s32.totalorder %s129, %s130
      %p141 = scmp.eq.s32.totalorder %s27, 0
      %p142 = por %p140, %p141
      %p143 = scmp.ne.s32.totalorder %s129, %s130
      %p144 = scmp.eq.s32.totalorder %s28, 2
      %p145 = por %p143, %p144
      %p147 = scmp.ne.s32.totalorder %s130, %s146
      %p148 = scmp.eq.s32.totalorder %s28, 0
      %p149 = por %p147, %p148
      %s150 = ssub.s32 %s30, %s44
      %s151 = ssub.s32 %s31, %s40
      %s152 = sor.u32 %s150, %s151
      %p153 = scmp.eq.s32.totalorder %s152, 0
      %s155 = sadd.s32 %s154, 1
      %s156 = scalar_select %p153, %s154, %s155
      %p159 = pneg %p153
      %p160 = scmp.eq.s32.totalorder %s22, 2
      %p161 = por %p159, %p160
      %p162 = scmp.ne.s32.totalorder %s154, %s157
      %p163 = scmp.eq.s32.totalorder %s22, 0
      %p164 = por %p162, %p163
      %p165 = scmp.ne.s32.totalorder %s154, %s157
      %p166 = scmp.eq.s32.totalorder %s27, 2
      %p167 = por %p165, %p166
      %p168 = scmp.ne.s32.totalorder %s157, %s158
      %p169 = scmp.eq.s32.totalorder %s27, 0
      %p170 = por %p168, %p169
      %p171 = scmp.ne.s32.totalorder %s157, %s158
      %p172 = scmp.eq.s32.totalorder %s28, 2
      %p173 = por %p171, %p172
      %p175 = scmp.ne.s32.totalorder %s158, %s174
      %p176 = scmp.eq.s32.totalorder %s28, 0
      %p177 = por %p175, %p176
      %s178 = ssub.s32 %s30, %s44
      %s179 = ssub.s32 %s31, %s40
      %s180 = sor.u32 %s178, %s179
      %p181 = scmp.eq.s32.totalorder %s180, 0
      %s183 = sadd.s32 %s182, 1
      %s184 = scalar_select %p181, %s182, %s183
      %p187 = pneg %p181
      %p188 = scmp.eq.s32.totalorder %s22, 2
      %p189 = por %p187, %p188
      %p190 = scmp.ne.s32.totalorder %s182, %s185
      %p191 = scmp.eq.s32.totalorder %s22, 0
      %p192 = por %p190, %p191
      %p193 = scmp.ne.s32.totalorder %s182, %s185
      %p194 = scmp.eq.s32.totalorder %s27, 2
      %p195 = por %p193, %p194
      %p196 = scmp.ne.s32.totalorder %s185, %s186
      %p197 = scmp.eq.s32.totalorder %s27, 0
      %p198 = por %p196, %p197
      %p199 = scmp.ne.s32.totalorder %s185, %s186
      %p200 = scmp.eq.s32.totalorder %s28, 2
      %p201 = por %p199, %p200
      %p203 = scmp.ne.s32.totalorder %s186, %s202
      %p204 = scmp.eq.s32.totalorder %s28, 0
      %p205 = por %p203, %p204
      %s206 = ssub.s32 %s30, %s44
      %p207 = scmp.eq.s32.totalorder %s206, 0
      %s209 = sadd.s32 %s208, 1
      %s210 = scalar_select %p207, %s208, %s209
      %p213 = pneg %p207
      %p214 = scmp.eq.s32.totalorder %s22, 2
      %p215 = por %p213, %p214
      %p216 = scmp.ne.s32.totalorder %s208, %s211
      %p217 = scmp.eq.s32.totalorder %s22, 0
      %p218 = por %p216, %p217
      %p219 = scmp.ne.s32.totalorder %s208, %s211
      %p220 = scmp.eq.s32.totalorder %s27, 2
      %p221 = por %p219, %p220
      %p222 = scmp.ne.s32.totalorder %s211, %s212
      %p223 = scmp.eq.s32.totalorder %s27, 0
      %p224 = por %p222, %p223
      %p225 = scmp.ne.s32.totalorder %s211, %s212
      %p226 = scmp.eq.s32.totalorder %s28, 2
      %p227 = por %p225, %p226
      %p229 = scmp.ne.s32.totalorder %s212, %s228
      %p230 = scmp.eq.s32.totalorder %s28, 0
      %p231 = por %p229, %p230
      %s232 = ssub.s32 %s29, %s48
      %p233 = scmp.eq.s32.totalorder %s232, 0
      %s235 = sadd.s32 %s234, 1
      %s236 = scalar_select %p233, %s234, %s235
      %p239 = pneg %p233
      %p240 = scmp.eq.s32.totalorder %s22, 2
      %p241 = por %p239, %p240
      %p242 = scmp.ne.s32.totalorder %s234, %s237
      %p243 = scmp.eq.s32.totalorder %s22, 0
      %p244 = por %p242, %p243
      %p245 = scmp.ne.s32.totalorder %s234, %s237
      %p246 = scmp.eq.s32.totalorder %s27, 2
      %p247 = por %p245, %p246
      %p248 = scmp.ne.s32.totalorder %s237, %s238
      %p249 = scmp.eq.s32.totalorder %s27, 0
      %p250 = por %p248, %p249
      %p251 = scmp.ne.s32.totalorder %s237, %s238
      %p252 = scmp.eq.s32.totalorder %s28, 2
      %p253 = por %p251, %p252
      %p255 = scmp.ne.s32.totalorder %s238, %s254
      %p256 = scmp.eq.s32.totalorder %s28, 0
      %p257 = por %p255, %p256
      %p258 = scmp.le.s32.totalorder 1, %s22
      %p259 = scmp.lt.s32.totalorder %s22, 4
      %p260 = pnand %p258, %p259
      %p261 = pneg %p260
      // Predicated region
      $region9: #{tpu_custom_call.1} parent=5 // pred_check
        _
      $region10: #{tpu_custom_call.1} parent=5 // pred_check_branch
        %263 = sbr.rel (%p260) target = $region12
      $region11: #{tpu_custom_call.1} parent=5 // pred_region
        %s264 = ssub.s32 %s22, 1
        // Predicated region
        $region13: #{tpu_custom_call.1} parent=11 // pred_check
          %p265 = pneg %p67
        $region14: #{tpu_custom_call.1} parent=11 // pred_check_branch
          %267 = sbr.rel (%p265) target = $region16
        $region15: #{tpu_custom_call.1} parent=11 // pred_region
          %s268 = smul.u32 2, %s32
          %p269 = scmp.lt.s32.totalorder %s268, 1
          %s270 = scalar_select %p269, %s268, 1
          %s271 = smul.addr %s270, 8
          %s272 = scalar_lea.vmem %s1, %s271
          %s273 = smul.u32 2, %s32
        $region16: #{tpu_custom_call.1} parent=11 // pred_fallthru
          _
        // Predicated region
        $region17: #{tpu_custom_call.1} parent=11 // pred_check
          %p274 = pneg %p88
        $region18: #{tpu_custom_call.1} parent=11 // pred_check_branch
          %276 = sbr.rel (%p274) target = $region20
        $region19: #{tpu_custom_call.1} parent=11 // pred_region
          _
        $region20: #{tpu_custom_call.1} parent=11 // pred_fallthru
          _
        // Predicated region
        $region21: #{tpu_custom_call.1} parent=11 // pred_check
          %p277 = pneg %p114
        $region22: #{tpu_custom_call.1} parent=11 // pred_check_branch
          %279 = sbr.rel (%p277) target = $region24
        $region23: #{tpu_custom_call.1} parent=11 // pred_region
          %s280 = smul.u32 2, %s32
          %p281 = scmp.lt.s32.totalorder %s280, 1
          %s282 = scalar_select %p281, %s280, 1
          %s283 = smul.addr %s282, 4
          %s284 = scalar_lea.vmem %s3, %s283
          %s285 = smul.u32 2, %s32
        $region24: #{tpu_custom_call.1} parent=11 // pred_fallthru
          _
      $region12: #{tpu_custom_call.1} parent=5 // pred_fallthru
        _
      %p286 = scmp.lt.s32.totalorder %s22, 3
      // Predicated region
      $region25: #{tpu_custom_call.1} parent=5 // pred_check
        %p287 = pneg %p286
      $region26: #{tpu_custom_call.1} parent=5 // pred_check_branch
        %289 = sbr.rel (%p287) target = $region28
      $region27: #{tpu_custom_call.1} parent=5 // pred_region
        // Predicated region
        $region29: #{tpu_custom_call.1} parent=27 // pred_check
          %p290 = pneg %p136
        $region30: #{tpu_custom_call.1} parent=27 // pred_check_branch
          %292 = sbr.rel (%p290) target = $region32
        $region31: #{tpu_custom_call.1} parent=27 // pred_region
          %s293 = sand.u32 %s126, 1
          %s294 = scalar_lea.sflag [#allocation7], %s293
          %s295 = sand.u32 %s126, 1
          %s296 = smul.addr %s295, 128
          %s297 = scalar_lea.vmem [#allocation6], %s296
          %s298 = smul.u32 2, %s31
          %s300 = ssub.s32 2048, 2048
          %301 = vsyncadd %s294, %s300
          %s302 = smul.addr %s30, 32
          %s303 = sadd.s32 %s298, %s302
          %s304 = smul.addr %s303, 64
          %s305 = scalar_lea.hbm %s4, %s304
          %s306 = sshll.u32 %s297, 4
          %s307 = int_to_ptr.vmem [resolvable:$true] %s306
          %312 = dma.hbm_to_vmem [thread:$0]  %s305, 2048, %s307, %s294, 128, 128, 8
        $region32: #{tpu_custom_call.1} parent=27 // pred_fallthru
          _
        // Predicated region
        $region33: #{tpu_custom_call.1} parent=27 // pred_check
          %p313 = pneg %p164
        $region34: #{tpu_custom_call.1} parent=27 // pred_check_branch
          %315 = sbr.rel (%p313) target = $region36
        $region35: #{tpu_custom_call.1} parent=27 // pred_region
          %s316 = smul.u32 2, %s31
          %p317 = scmp.lt.s32.totalorder %s30, 2
          %s318 = scalar_select %p317, %s30, 2
          %p319 = scmp.lt.s32.totalorder %s316, 1
          %s320 = scalar_select %p319, %s316, 1
          %s321 = smul.addr %s318, 2
          %s322 = sadd.s32 %s320, %s321
          %s323 = scalar_lea.vmem %s5, %s322
          %s324 = smul.u32 2, %s31
        $region36: #{tpu_custom_call.1} parent=27 // pred_fallthru
          _
        // Predicated region
        $region37: #{tpu_custom_call.1} parent=27 // pred_check
          %p325 = pneg %p192
        $region38: #{tpu_custom_call.1} parent=27 // pred_check_branch
          %327 = sbr.rel (%p325) target = $region40
        $region39: #{tpu_custom_call.1} parent=27 // pred_region
          %s328 = sand.u32 %s182, 1
          %s329 = scalar_lea.sflag [#allocation10], %s328
          %s330 = sand.u32 %s182, 1
          %s331 = smul.addr %s330, 128
          %s332 = scalar_lea.vmem [#allocation9], %s331
          %s333 = smul.u32 32, %s31
          %s335 = ssub.s32 2048, 2048
          %336 = vsyncadd %s329, %s335
          %s337 = smul.addr %s30, 32
          %s338 = sadd.s32 %s333, %s337
          %s339 = smul.addr %s338, 64
          %s340 = scalar_lea.hbm %s6, %s339
          %s341 = sshll.u32 %s332, 4
          %s342 = int_to_ptr.vmem [resolvable:$true] %s341
          %347 = dma.hbm_to_vmem [thread:$0]  %s340, 2048, %s342, %s329, 64, 64, 4
        $region40: #{tpu_custom_call.1} parent=27 // pred_fallthru
          _
        // Predicated region
        $region41: #{tpu_custom_call.1} parent=27 // pred_check
          %p348 = pneg %p218
        $region42: #{tpu_custom_call.1} parent=27 // pred_check_branch
          %350 = sbr.rel (%p348) target = $region44
        $region43: #{tpu_custom_call.1} parent=27 // pred_region
          %p351 = scmp.lt.s32.totalorder %s30, 2
          %s352 = scalar_select %p351, %s30, 2
          %s353 = scalar_lea.vmem %s7, %s352
        $region44: #{tpu_custom_call.1} parent=27 // pred_fallthru
          _
      $region28: #{tpu_custom_call.1} parent=5 // pred_fallthru
        _
      %p354 = scmp.le.s32.totalorder 1, %s22
      %p355 = scmp.lt.s32.totalorder %s22, 4
      %p356 = pnand %p354, %p355
      %p357 = pneg %p356
      // Predicated region
      $region45: #{tpu_custom_call.1} parent=5 // pred_check
        _
      $region46: #{tpu_custom_call.1} parent=5 // pred_check_branch
        %359 = sbr.rel (%p356) target = $region48
      $region47: #{tpu_custom_call.1} parent=5 // pred_region
        %s360 = ssub.s32 %s22, 1
        %s361 = sand.u32 %s129, 1
        %s362 = scalar_lea.sflag [#allocation7], %s361
        %s363 = sand.u32 %s129, 1
        %s364 = smul.addr %s363, 128
        %s365 = scalar_lea.vmem [#allocation6], %s364
        // Predicated region
        $region49: #{tpu_custom_call.1} parent=47 // pred_check
          %p366 = pneg %p142
        $region50: #{tpu_custom_call.1} parent=47 // pred_check_branch
          %368 = sbr.rel (%p366) target = $region52
        $region51: #{tpu_custom_call.1} parent=47 // pred_region
          %369 = dma.done %s362, 2048
        $region52: #{tpu_custom_call.1} parent=47 // pred_fallthru
          _
        %s370 = sand.u32 %s185, 1
        %s371 = scalar_lea.sflag [#allocation10], %s370
        %s372 = sand.u32 %s185, 1
        %s373 = smul.addr %s372, 128
        %s374 = scalar_lea.vmem [#allocation9], %s373
        // Predicated region
        $region53: #{tpu_custom_call.1} parent=47 // pred_check
          %p375 = pneg %p198
        $region54: #{tpu_custom_call.1} parent=47 // pred_check_branch
          %377 = sbr.rel (%p375) target = $region56
        $region55: #{tpu_custom_call.1} parent=47 // pred_region
          %378 = dma.done %s371, 2048
        $region56: #{tpu_custom_call.1} parent=47 // pred_fallthru
          _
        %s379 = smul.u32 2, %s32
        %p380 = scmp.lt.s32.totalorder %s379, 1
        %s381 = scalar_select %p380, %s379, 1
        %s382 = smul.addr %s381, 8
        %s383 = scalar_lea.vmem %s1, %s382
        %p384 = pneg %p67
        %p385 = pneg %p64
        %p386 = pneg %p88
        %p387 = pneg %p85
        %s388 = smul.u32 2, %s32
        %p389 = scmp.lt.s32.totalorder %s388, 1
        %s390 = scalar_select %p389, %s388, 1
        %s391 = smul.addr %s390, 4
        %s392 = scalar_lea.vmem %s3, %s391
        %p393 = pneg %p114
        %p394 = pneg %p111
        %s395 = sand.u32 %s129, 1
        %s396 = scalar_lea.sflag [#allocation7], %s395
        %s397 = sand.u32 %s129, 1
        %s398 = smul.addr %s397, 128
        %s399 = scalar_lea.vmem [#allocation6], %s398
        %p400 = pneg %p142
        %p401 = pneg %p139
        %s402 = smul.u32 2, %s34
        %p403 = scmp.lt.s32.totalorder %s33, 2
        %s404 = scalar_select %p403, %s33, 2
        %p405 = scmp.lt.s32.totalorder %s402, 1
        %s406 = scalar_select %p405, %s402, 1
        %s407 = smul.addr %s404, 2
        %s408 = sadd.s32 %s406, %s407
        %s409 = scalar_lea.vmem %s5, %s408
        %p410 = pneg %p170
        %p411 = pneg %p167
        %s412 = sand.u32 %s185, 1
        %s413 = scalar_lea.sflag [#allocation10], %s412
        %s414 = sand.u32 %s185, 1
        %s415 = smul.addr %s414, 128
        %s416 = scalar_lea.vmem [#allocation9], %s415
        %p417 = pneg %p198
        %p418 = pneg %p195
        %p419 = scmp.lt.s32.totalorder %s33, 2
        %s420 = scalar_select %p419, %s33, 2
        %s421 = scalar_lea.vmem %s7, %s420
        %p422 = pneg %p224
        %p423 = pneg %p221
        %p424 = pneg %p250
        %p425 = pneg %p247
        %s426 = smul.u32 2, %s32
        %p427 = scmp.lt.s32.totalorder %s426, 1
        %s428 = scalar_select %p427, %s426, 1
        %s429 = smul.addr %s428, 8
        %s430 = scalar_lea.vmem %s1, %s429
        %s431 = smul.u32 2, %s32
        %s432 = smul.u32 2, %s32
        %p433 = scmp.lt.s32.totalorder %s432, 1
        %s434 = scalar_select %p433, %s432, 1
        %s435 = smul.addr %s434, 4
        %s436 = scalar_lea.vmem %s3, %s435
        %s437 = smul.u32 2, %s32
        %s438 = smul.u32 2, %s34
        %s439 = smul.u32 2, %s34
        %p440 = scmp.lt.s32.totalorder %s33, 2
        %s441 = scalar_select %p440, %s33, 2
        %p442 = scmp.lt.s32.totalorder %s439, 1
        %s443 = scalar_select %p442, %s439, 1
        %s444 = smul.addr %s441, 2
        %s445 = sadd.s32 %s443, %s444
        %s446 = scalar_lea.vmem %s5, %s445
        %s447 = smul.u32 2, %s34
        %s448 = smul.u32 32, %s34
        %p449 = scmp.lt.s32.totalorder %s33, 2
        %s450 = scalar_select %p449, %s33, 2
        %s451 = scalar_lea.vmem %s7, %s450
        %s452 = smul.u32 2, %s32
        %s454 = sld [smem:[#allocation5 + %s32]]
        %p455 = scmp.ne.s32.totalorder %s454, 0
        %p456 = scmp.eq.s32.totalorder %s33, 0
        %p457 = scmp.eq.s32.totalorder %s34, 0
        %p458 = pnand %p456, %p457
        %p459 = pneg %p458
        // Predicated region
        $region57: #{tpu_custom_call.1} parent=47 // pred_check
          _
        $region58: #{tpu_custom_call.1} parent=47 // pred_check_branch
          %461 = sbr.rel (%p458) target = $region60
        $region59: #{tpu_custom_call.1} parent=47 // pred_region
          %462 = vst [vmem:[#allocation3] sm:$0xff] 0.0
          %463 = vst [vmem:[#allocation3 + $0x8] sm:$0xff] 0.0
        $region60: #{tpu_custom_call.1} parent=47 // pred_fallthru
          _
        %p464 = pnand %p459, %p455
        %p465 = pneg %p464
        // Predicated region
        $region61: #{tpu_custom_call.1} parent=47 // pred_check
          _
        $region62: #{tpu_custom_call.1} parent=47 // pred_check_branch
          %467 = sbr.rel (%p464) target = $region64
        $region63: #{tpu_custom_call.1} parent=47 // pred_region
          %v468 = vld [vmem:[%s436] sm:$0xf]
          %v469 = vld [vmem:[%s436 + $0x4] sm:$0xf]
          %v470 = vld [vmem:[%s2] sm:$0xf]
          %v471 = vld [vmem:[%s2 + $0x4] sm:$0xf]
          %v472 = vld [vmem:[%s2 + $0x8] sm:$0xf]
          %v473 = vld [vmem:[%s2 + $0xc] sm:$0xf]
          %v474 = vld [vmem:[%s2 + $0x10] sm:$0xf]
          %v475 = vld [vmem:[%s2 + $0x14] sm:$0xf]
          %v476 = vld [vmem:[%s2 + $0x18] sm:$0xf]
          %v477 = vld [vmem:[%s2 + $0x1c] sm:$0xf]
          %v478 = vld [vmem:[%s2 + $0x20] sm:$0xf]
          %v479 = vld [vmem:[%s2 + $0x24] sm:$0xf]
          %v480 = vld [vmem:[%s2 + $0x28] sm:$0xf]
          %v481 = vld [vmem:[%s2 + $0x2c] sm:$0xf]
          %v482 = vld [vmem:[%s2 + $0x30] sm:$0xf]
          %v483 = vld [vmem:[%s2 + $0x34] sm:$0xf]
          %v484 = vld [vmem:[%s2 + $0x38] sm:$0xf]
          %v485 = vld [vmem:[%s2 + $0x3c] sm:$0xf]
          %v488 = vunpack.c.l.b16 %v468
          %v489 = vunpack.c.l.b16 %v469
          %v490 = vpack.c.b16 %v489, %v488
          %v508 = vunpack.c.l.b16 %v470
          %v509 = vunpack.c.l.b16 %v471
          %v510 = vunpack.c.l.b16 %v472
          %v511 = vunpack.c.l.b16 %v473
          %v512 = vunpack.c.l.b16 %v474
          %v513 = vunpack.c.l.b16 %v475
          %v514 = vunpack.c.l.b16 %v476
          %v515 = vunpack.c.l.b16 %v477
          %v516 = vunpack.c.l.b16 %v478
          %v517 = vunpack.c.l.b16 %v479
          %v518 = vunpack.c.l.b16 %v480
          %v519 = vunpack.c.l.b16 %v481
          %v520 = vunpack.c.l.b16 %v482
          %v521 = vunpack.c.l.b16 %v483
          %v522 = vunpack.c.l.b16 %v484
          %v523 = vunpack.c.l.b16 %v485
          %v524 = vpack.c.b16 %v509, %v508
          %v525 = vpack.c.b16 %v511, %v510
          %v526 = vpack.c.b16 %v513, %v512
          %v527 = vpack.c.b16 %v515, %v514
          %v528 = vpack.c.b16 %v517, %v516
          %v529 = vpack.c.b16 %v519, %v518
          %v530 = vpack.c.b16 %v521, %v520
          %v531 = vpack.c.b16 %v523, %v522
          %540 = vmatprep.subr.bf16.mxu0 0
          %541 = vmatpush1.bf16.msra.mxu0 %v524
          %542 = vmatprep.subr.bf16.mxu0 0
          %543 = vmatpush1.bf16.msra.mxu0 %v525
          %544 = vmatprep.subr.bf16.mxu0 0
          %545 = vmatpush1.bf16.msra.mxu0 %v526
          %546 = vmatprep.subr.bf16.mxu0 0
          %547 = vmatpush1.bf16.msra.mxu0 %v527
          %548 = vmatprep.subr.bf16.mxu0 0
          %549 = vmatpush1.bf16.msra.mxu0 %v528
          %550 = vmatprep.subr.bf16.mxu0 0
          %551 = vmatpush1.bf16.msra.mxu0 %v529
          %552 = vmatprep.subr.bf16.mxu0 0
          %553 = vmatpush1.bf16.msra.mxu0 %v530
          %554 = vmatprep.subr.bf16.mxu0 0
          %555 = vmatpush1.bf16.msra.mxu0 %v531
          %556 = vmatprep.subr.bf16.mxu0 0
          %557 = vmatpush1.bf16.msra.mxu0 0
          %558 = vmatprep.subr.bf16.mxu0 0
          %559 = vmatpush1.bf16.msra.mxu0 0
          %560 = vmatprep.subr.bf16.mxu0 0
          %561 = vmatpush1.bf16.msra.mxu0 0
          %562 = vmatprep.subr.bf16.mxu0 0
          %563 = vmatpush1.bf16.msra.mxu0 0
          %564 = vmatprep.subr.bf16.mxu0 0
          %565 = vmatpush1.bf16.msra.mxu0 0
          %566 = vmatprep.subr.bf16.mxu0 0
          %567 = vmatpush1.bf16.msra.mxu0 0
          %568 = vmatprep.subr.bf16.mxu0 0
          %569 = vmatpush1.bf16.msra.mxu0 0
          %570 = vmatprep.subr.bf16.mxu0 0
          %571 = vmatpush1.bf16.msra.mxu0 0
          %572 = vmatprep.mubr.bf16.mxu0 0
          %573 = vmatmul.mubr.bf16.gmra.mrb[0].mxu0 %v490
          %v574 = vpop.f32.mrb[0].mxu0
          %v575 = vadd.f32 0.0, %v574
          %v576 = vpop.f32.mrb[0].mxu0
          %v577 = vpop.f32.mrb[0].mxu0
          %v578 = vadd.f32 0.0, %v577
          %v579 = vpop.f32.mrb[0].mxu0
          %580 = vdwg.mxu0
          %v581 = vld [vmem:[%s430] sm:$0xff]
          %v582 = vld [vmem:[%s430 + $0x8] sm:$0xff]
          %vm583 = vcmask 23552
          %v584 = vsel %vm583, %v575, -inf
          %585 = vmax.xlane.f32.xlu0 %v584
          %v586 = vpop.xlane.xlu0 %585
          %v587 = vsel %vm583, %v578, -inf
          %588 = vmax.xlane.f32.xlu0 %v587
          %v589 = vpop.xlane.xlu0 %588
          %v590 = vsub.f32 %v575, %v586
          %v591 = vsub.f32 %v578, %v589
          %v592 = vmul.f32 %v590, 1.442695
          %v593 = vpow.pop %v592
          %v594 = vmul.f32 %v591, 1.442695
          %v595 = vpow.pop %v594
          %v596 = vsel %vm583, %v593, 0.0
          %597 = vadd.xlane.f32.xlu0 %v596
          %v598 = vpop.xlane.xlu0 %597
          %v599 = vsel %vm583, %v595, 0.0
          %600 = vadd.xlane.f32.xlu0 %v599
          %v601 = vpop.xlane.xlu0 %600
          %v602 = vrcp.pop %v598
          %v603 = vmul.f32 %v593, %v602
          %v604 = vrcp.pop %v601
          %v605 = vmul.f32 %v595, %v604
          %vm606 = vcmp.eq.s32.totalorder %v581, 1
          %vm607 = vcmp.eq.s32.totalorder %v582, 1
          %v608 = vsel %vm606, 1, 0
          %v609 = vsel %vm607, 1, 0
          %610 = vset.pattern.permute.xlu0 0
          %611 = vperm.xlu0 %610, %v608
          %v612 = vpop.permute.xlu0 %611
          %613 = vset.pattern.permute.xlu0 0
          %614 = vperm.xlu0 %613, %v609
          %v615 = vpop.permute.xlu0 %614
          %vm616 = vcmp.eq.s32.totalorder %v612, 1
          %vm617 = vcmp.eq.s32.totalorder %v615, 1
          %v618 = vsel %vm616, %v603, 0.0
          %v619 = vsel %vm617, %v605, 0.0
          %v620 = vadd.f32 %v618, 0.0
          %v621 = vadd.f32 %v619, 0.0
          %vm622 = vcmask 48152
          %v623 = vsel %vm622, %v575, -inf
          %624 = vmax.xlane.f32.xlu0 %v623
          %v625 = vpop.xlane.xlu0 %624
          %v626 = vsel %vm622, %v578, -inf
          %627 = vmax.xlane.f32.xlu0 %v626
          %v628 = vpop.xlane.xlu0 %627
          %v629 = vsub.f32 %v575, %v625
          %v630 = vsub.f32 %v578, %v628
          %v631 = vmul.f32 %v629, 1.442695
          %v632 = vpow.pop %v631
          %v633 = vmul.f32 %v630, 1.442695
          %v634 = vpow.pop %v633
          %637 = vrot.lane.b32.xlu0 %v632, 125
          %v638 = vpop.permute.xlu0 %637
          %639 = vrot.lane.b32.xlu0 %v634, 125
          %v640 = vpop.permute.xlu0 %639
          %v643 = vsel %vm583, %v638, 0.0
          %644 = vadd.xlane.f32.xlu0 %v643
          %v645 = vpop.xlane.xlu0 %644
          %v646 = vsel %vm583, %v640, 0.0
          %647 = vadd.xlane.f32.xlu0 %v646
          %v648 = vpop.xlane.xlu0 %647
          %v649 = vrcp.pop %v645
          %v650 = vmul.f32 %v632, %v649
          %v651 = vrcp.pop %v648
          %v652 = vmul.f32 %v634, %v651
          %vm653 = vcmp.eq.s32.totalorder %v581, 2
          %vm654 = vcmp.eq.s32.totalorder %v582, 2
          %v655 = vsel %vm653, 1, 0
          %v656 = vsel %vm654, 1, 0
          %657 = vset.pattern.permute.xlu0 0
          %658 = vperm.xlu0 %657, %v655
          %v659 = vpop.permute.xlu0 %658
          %660 = vset.pattern.permute.xlu0 0
          %661 = vperm.xlu0 %660, %v656
          %v662 = vpop.permute.xlu0 %661
          %vm663 = vcmp.eq.s32.totalorder %v659, 1
          %vm664 = vcmp.eq.s32.totalorder %v662, 1
          %v665 = vsel %vm663, %v650, 0.0
          %v666 = vsel %vm664, %v652, 0.0
          %669 = vrot.lane.b32.xlu0 %v665, 125
          %v670 = vpop.permute.xlu0 %669
          %671 = vrot.lane.b32.xlu0 %v666, 125
          %v672 = vpop.permute.xlu0 %671
          %v675 = vadd.f32 %v620, %v670
          %v676 = vadd.f32 %v621, %v672
          %v677 = vlaneseq
          %v678 = vand.u32 %v677, 127
          %vm679 = vcmp.eq.s32.totalorder %v678, 0
          %v680 = vsel %vm679, %v675, 0.0
          %v681 = vsel %vm679, %v676, 0.0
          %v682 = vsel %vm583, %v680, 0.0
          %683 = vadd.xlane.f32.xlu0 %v682
          %v684 = vpop.xlane.xlu0 %683
          %v685 = vsel %vm583, %v681, 0.0
          %686 = vadd.xlane.f32.xlu0 %v685
          %v687 = vpop.xlane.xlu0 %686
          %vm688 = vcmask 7168
          %689 = vst.msk [vmem:[#allocation2] sm:$0xff] %vm688, %v684
          %690 = vst.msk [vmem:[#allocation2 + $0x8] sm:$0xff] %vm688, %v687
          %vm691 = vcmp.eq.s32.totalorder %v678, 1
          %v692 = vsel %vm691, %v675, 0.0
          %v693 = vsel %vm691, %v676, 0.0
          %v694 = vsel %vm583, %v692, 0.0
          %695 = vadd.xlane.f32.xlu0 %v694
          %v696 = vpop.xlane.xlu0 %695
          %v697 = vsel %vm583, %v693, 0.0
          %698 = vadd.xlane.f32.xlu0 %v697
          %v699 = vpop.xlane.xlu0 %698
          %s700 = scalar_lea.vmem [#allocation2], 16
          %701 = vst.msk [vmem:[%s700] sm:$0xff] %vm688, %v696
          %702 = vst.msk [vmem:[%s700 + $0x8] sm:$0xff] %vm688, %v699
          %vm703 = vcmp.eq.s32.totalorder %v678, 2
          %v704 = vsel %vm703, %v675, 0.0
          %v705 = vsel %vm703, %v676, 0.0
          %v706 = vsel %vm583, %v704, 0.0
          %707 = vadd.xlane.f32.xlu0 %v706
          %v708 = vpop.xlane.xlu0 %707
          %v709 = vsel %vm583, %v705, 0.0
          %710 = vadd.xlane.f32.xlu0 %v709
          %v711 = vpop.xlane.xlu0 %710
          %s712 = scalar_lea.vmem [#allocation2], 32
          %713 = vst.msk [vmem:[%s712] sm:$0xff] %vm688, %v708
          %714 = vst.msk [vmem:[%s712 + $0x8] sm:$0xff] %vm688, %v711
        $region64: #{tpu_custom_call.1} parent=47 // pred_fallthru
          _
        // Predicated region
        $region65: #{tpu_custom_call.1} parent=47 // pred_check
          %p715 = pneg %p455
        $region66: #{tpu_custom_call.1} parent=47 // pred_check_branch
          %717 = sbr.rel (%p715) target = $region68
        $region67: #{tpu_custom_call.1} parent=47 // pred_region
          %v718 = vld [vmem:[%s436] sm:$0xf]
          %v719 = vld [vmem:[%s436 + $0x4] sm:$0xf]
          %v720 = vld [vmem:[%s365] sm:$0xff]
          %v721 = vld [vmem:[%s365 + $0x8] sm:$0xff]
          %v722 = vld [vmem:[%s365 + $0x10] sm:$0xff]
          %v723 = vld [vmem:[%s365 + $0x18] sm:$0xff]
          %v724 = vld [vmem:[%s365 + $0x20] sm:$0xff]
          %v725 = vld [vmem:[%s365 + $0x28] sm:$0xff]
          %v726 = vld [vmem:[%s365 + $0x30] sm:$0xff]
          %v727 = vld [vmem:[%s365 + $0x38] sm:$0xff]
          %v728 = vld [vmem:[%s365 + $0x40] sm:$0xff]
          %v729 = vld [vmem:[%s365 + $0x48] sm:$0xff]
          %v730 = vld [vmem:[%s365 + $0x50] sm:$0xff]
          %v731 = vld [vmem:[%s365 + $0x58] sm:$0xff]
          %v732 = vld [vmem:[%s365 + $0x60] sm:$0xff]
          %v733 = vld [vmem:[%s365 + $0x68] sm:$0xff]
          %v734 = vld [vmem:[%s365 + $0x70] sm:$0xff]
          %v735 = vld [vmem:[%s365 + $0x78] sm:$0xff]
          %v736 = vld [vmem:[%s446] sm:$0x3]
          %v738 = vlaneseq
          %v739 = vshrl.u32 %v738, 7
          %v740 = vsub.s32 0, %v739
          %v741 = vrot.slane %v736, %v740
          %v742 = vlaneseq
          %v743 = vshrl.u32 %v742, 7
          %v744 = vsub.s32 1, %v743
          %v745 = vrot.slane %v736, %v744
          %v750 = vunpack.c.l.b16 %v718
          %v751 = vunpack.c.l.b16 %v719
          %v752 = vpack.c.b16 %v751, %v750
          %v770 = vunpack.c.l.b16 %v720
          %v771 = vunpack.c.h.b16 %v720
          %v772 = vunpack.c.l.b16 %v721
          %v773 = vunpack.c.h.b16 %v721
          %v774 = vunpack.c.l.b16 %v722
          %v775 = vunpack.c.h.b16 %v722
          %v776 = vunpack.c.l.b16 %v723
          %v777 = vunpack.c.h.b16 %v723
          %v778 = vunpack.c.l.b16 %v724
          %v779 = vunpack.c.h.b16 %v724
          %v780 = vunpack.c.l.b16 %v725
          %v781 = vunpack.c.h.b16 %v725
          %v782 = vunpack.c.l.b16 %v726
          %v783 = vunpack.c.h.b16 %v726
          %v784 = vunpack.c.l.b16 %v727
          %v785 = vunpack.c.h.b16 %v727
          %v786 = vunpack.c.l.b16 %v728
          %v787 = vunpack.c.h.b16 %v728
          %v788 = vunpack.c.l.b16 %v729
          %v789 = vunpack.c.h.b16 %v729
          %v790 = vunpack.c.l.b16 %v730
          %v791 = vunpack.c.h.b16 %v730
          %v792 = vunpack.c.l.b16 %v731
          %v793 = vunpack.c.h.b16 %v731
          %v794 = vunpack.c.l.b16 %v732
          %v795 = vunpack.c.h.b16 %v732
          %v796 = vunpack.c.l.b16 %v733
          %v797 = vunpack.c.h.b16 %v733
          %v798 = vunpack.c.l.b16 %v734
          %v799 = vunpack.c.h.b16 %v734
          %v800 = vunpack.c.l.b16 %v735
          %v801 = vunpack.c.h.b16 %v735
          %v802 = vpack.c.b16 %v772, %v770
          %v803 = vpack.c.b16 %v773, %v771
          %v804 = vpack.c.b16 %v776, %v774
          %v805 = vpack.c.b16 %v777, %v775
          %v806 = vpack.c.b16 %v780, %v778
          %v807 = vpack.c.b16 %v781, %v779
          %v808 = vpack.c.b16 %v784, %v782
          %v809 = vpack.c.b16 %v785, %v783
          %v810 = vpack.c.b16 %v788, %v786
          %v811 = vpack.c.b16 %v789, %v787
          %v812 = vpack.c.b16 %v792, %v790
          %v813 = vpack.c.b16 %v793, %v791
          %v814 = vpack.c.b16 %v796, %v794
          %v815 = vpack.c.b16 %v797, %v795
          %v816 = vpack.c.b16 %v800, %v798
          %v817 = vpack.c.b16 %v801, %v799
          %834 = vmatprep.subr.bf16.mxu0 %v803
          %835 = vmatpush1.bf16.msra.mxu0 %v802
          %836 = vmatprep.subr.bf16.mxu0 %v805
          %837 = vmatpush1.bf16.msra.mxu0 %v804
          %838 = vmatprep.subr.bf16.mxu0 %v807
          %839 = vmatpush1.bf16.msra.mxu0 %v806
          %840 = vmatprep.subr.bf16.mxu0 %v809
          %841 = vmatpush1.bf16.msra.mxu0 %v808
          %842 = vmatprep.subr.bf16.mxu0 %v811
          %843 = vmatpush1.bf16.msra.mxu0 %v810
          %844 = vmatprep.subr.bf16.mxu0 %v813
          %845 = vmatpush1.bf16.msra.mxu0 %v812
          %846 = vmatprep.subr.bf16.mxu0 %v815
          %847 = vmatpush1.bf16.msra.mxu0 %v814
          %848 = vmatprep.subr.bf16.mxu0 %v817
          %849 = vmatpush1.bf16.msra.mxu0 %v816
          %850 = vmatprep.subr.bf16.mxu0 0
          %851 = vmatpush1.bf16.msra.mxu0 0
          %852 = vmatprep.subr.bf16.mxu0 0
          %853 = vmatpush1.bf16.msra.mxu0 0
          %854 = vmatprep.subr.bf16.mxu0 0
          %855 = vmatpush1.bf16.msra.mxu0 0
          %856 = vmatprep.subr.bf16.mxu0 0
          %857 = vmatpush1.bf16.msra.mxu0 0
          %858 = vmatprep.subr.bf16.mxu0 0
          %859 = vmatpush1.bf16.msra.mxu0 0
          %860 = vmatprep.subr.bf16.mxu0 0
          %861 = vmatpush1.bf16.msra.mxu0 0
          %862 = vmatprep.subr.bf16.mxu0 0
          %863 = vmatpush1.bf16.msra.mxu0 0
          %864 = vmatprep.subr.bf16.mxu0 0
          %865 = vmatpush1.bf16.msra.mxu0 0
          %866 = vmatprep.mubr.bf16.mxu0 0
          %867 = vmatmul.mubr.bf16.gmra.mrb[0].mxu0 %v752
          %v868 = vpop.f32.mrb[0].mxu0
          %v869 = vadd.f32 %v741, %v868
          %v870 = vpop.f32.mrb[0].mxu0
          %v871 = vadd.f32 %v745, %v870
          %v872 = vpop.f32.mrb[0].mxu0
          %v873 = vadd.f32 %v741, %v872
          %v874 = vpop.f32.mrb[0].mxu0
          %v875 = vadd.f32 %v745, %v874
          %876 = vdwg.mxu0
          %v877 = vmax.f32 %v869, 0.0
          %v878 = vmax.f32 %v871, 0.0
          %v879 = vmax.f32 %v873, 0.0
          %v880 = vmax.f32 %v875, 0.0
          %v881 = vpack.c.bf16 %v879, %v877
          %v882 = vpack.c.bf16 %v880, %v878
          %v883 = vld [vmem:[%s374] sm:$0xf]
          %v884 = vld [vmem:[%s374 + $0x4] sm:$0xf]
          %v885 = vld [vmem:[%s374 + $0x8] sm:$0xf]
          %v886 = vld [vmem:[%s374 + $0xc] sm:$0xf]
          %v887 = vld [vmem:[%s374 + $0x10] sm:$0xf]
          %v888 = vld [vmem:[%s374 + $0x14] sm:$0xf]
          %v889 = vld [vmem:[%s374 + $0x18] sm:$0xf]
          %v890 = vld [vmem:[%s374 + $0x1c] sm:$0xf]
          %v891 = vld [vmem:[%s374 + $0x20] sm:$0xf]
          %v892 = vld [vmem:[%s374 + $0x24] sm:$0xf]
          %v893 = vld [vmem:[%s374 + $0x28] sm:$0xf]
          %v894 = vld [vmem:[%s374 + $0x2c] sm:$0xf]
          %v895 = vld [vmem:[%s374 + $0x30] sm:$0xf]
          %v896 = vld [vmem:[%s374 + $0x34] sm:$0xf]
          %v897 = vld [vmem:[%s374 + $0x38] sm:$0xf]
          %v898 = vld [vmem:[%s374 + $0x3c] sm:$0xf]
          %v899 = vld [vmem:[%s374 + $0x40] sm:$0xf]
          %v900 = vld [vmem:[%s374 + $0x44] sm:$0xf]
          %v901 = vld [vmem:[%s374 + $0x48] sm:$0xf]
          %v902 = vld [vmem:[%s374 + $0x4c] sm:$0xf]
          %v903 = vld [vmem:[%s374 + $0x50] sm:$0xf]
          %v904 = vld [vmem:[%s374 + $0x54] sm:$0xf]
          %v905 = vld [vmem:[%s374 + $0x58] sm:$0xf]
          %v906 = vld [vmem:[%s374 + $0x5c] sm:$0xf]
          %v907 = vld [vmem:[%s374 + $0x60] sm:$0xf]
          %v908 = vld [vmem:[%s374 + $0x64] sm:$0xf]
          %v909 = vld [vmem:[%s374 + $0x68] sm:$0xf]
          %v910 = vld [vmem:[%s374 + $0x6c] sm:$0xf]
          %v911 = vld [vmem:[%s374 + $0x70] sm:$0xf]
          %v912 = vld [vmem:[%s374 + $0x74] sm:$0xf]
          %v913 = vld [vmem:[%s374 + $0x78] sm:$0xf]
          %v914 = vld [vmem:[%s374 + $0x7c] sm:$0xf]
          %v915 = vld [vmem:[%s451] sm:$0x1]
          %s916 = scalar_select %p457, 1, 0
          %v917 = vstv %s916
          %vm918 = vcmp.eq.s32.totalorder %v917, 1
          %v919 = vsel %vm918, %v915, 0.0
          %v921 = vlaneseq
          %v922 = vshrl.u32 %v921, 7
          %v923 = vsub.s32 0, %v922
          %v924 = vrot.slane %v919, %v923
          %v958 = vunpack.c.l.b16 %v883
          %v959 = vunpack.c.l.b16 %v884
          %v960 = vunpack.c.l.b16 %v885
          %v961 = vunpack.c.l.b16 %v886
          %v962 = vunpack.c.l.b16 %v887
          %v963 = vunpack.c.l.b16 %v888
          %v964 = vunpack.c.l.b16 %v889
          %v965 = vunpack.c.l.b16 %v890
          %v966 = vunpack.c.l.b16 %v891
          %v967 = vunpack.c.l.b16 %v892
          %v968 = vunpack.c.l.b16 %v893
          %v969 = vunpack.c.l.b16 %v894
          %v970 = vunpack.c.l.b16 %v895
          %v971 = vunpack.c.l.b16 %v896
          %v972 = vunpack.c.l.b16 %v897
          %v973 = vunpack.c.l.b16 %v898
          %v974 = vunpack.c.l.b16 %v899
          %v975 = vunpack.c.l.b16 %v900
          %v976 = vunpack.c.l.b16 %v901
          %v977 = vunpack.c.l.b16 %v902
          %v978 = vunpack.c.l.b16 %v903
          %v979 = vunpack.c.l.b16 %v904
          %v980 = vunpack.c.l.b16 %v905
          %v981 = vunpack.c.l.b16 %v906
          %v982 = vunpack.c.l.b16 %v907
          %v983 = vunpack.c.l.b16 %v908
          %v984 = vunpack.c.l.b16 %v909
          %v985 = vunpack.c.l.b16 %v910
          %v986 = vunpack.c.l.b16 %v911
          %v987 = vunpack.c.l.b16 %v912
          %v988 = vunpack.c.l.b16 %v913
          %v989 = vunpack.c.l.b16 %v914
          %v990 = vpack.c.b16 %v959, %v958
          %v991 = vpack.c.b16 %v961, %v960
          %v992 = vpack.c.b16 %v963, %v962
          %v993 = vpack.c.b16 %v965, %v964
          %v994 = vpack.c.b16 %v967, %v966
          %v995 = vpack.c.b16 %v969, %v968
          %v996 = vpack.c.b16 %v971, %v970
          %v997 = vpack.c.b16 %v973, %v972
          %v998 = vpack.c.b16 %v975, %v974
          %v999 = vpack.c.b16 %v977, %v976
          %v1000 = vpack.c.b16 %v979, %v978
          %v1001 = vpack.c.b16 %v981, %v980
          %v1002 = vpack.c.b16 %v983, %v982
          %v1003 = vpack.c.b16 %v985, %v984
          %v1004 = vpack.c.b16 %v987, %v986
          %v1005 = vpack.c.b16 %v989, %v988
          %1022 = vmatprep.subr.bf16.mxu0 0
          %1023 = vmatpush1.bf16.msra.mxu0 %v990
          %1024 = vmatprep.subr.bf16.mxu0 0
          %1025 = vmatpush1.bf16.msra.mxu0 %v991
          %1026 = vmatprep.subr.bf16.mxu0 0
          %1027 = vmatpush1.bf16.msra.mxu0 %v992
          %1028 = vmatprep.subr.bf16.mxu0 0
          %1029 = vmatpush1.bf16.msra.mxu0 %v993
          %1030 = vmatprep.subr.bf16.mxu0 0
          %1031 = vmatpush1.bf16.msra.mxu0 %v994
          %1032 = vmatprep.subr.bf16.mxu0 0
          %1033 = vmatpush1.bf16.msra.mxu0 %v995
          %1034 = vmatprep.subr.bf16.mxu0 0
          %1035 = vmatpush1.bf16.msra.mxu0 %v996
          %1036 = vmatprep.subr.bf16.mxu0 0
          %1037 = vmatpush1.bf16.msra.mxu0 %v997
          %1038 = vmatprep.subr.bf16.mxu0 0
          %1039 = vmatpush1.bf16.msra.mxu0 %v998
          %1040 = vmatprep.subr.bf16.mxu0 0
          %1041 = vmatpush1.bf16.msra.mxu0 %v999
          %1042 = vmatprep.subr.bf16.mxu0 0
          %1043 = vmatpush1.bf16.msra.mxu0 %v1000
          %1044 = vmatprep.subr.bf16.mxu0 0
          %1045 = vmatpush1.bf16.msra.mxu0 %v1001
          %1046 = vmatprep.subr.bf16.mxu0 0
          %1047 = vmatpush1.bf16.msra.mxu0 %v1002
          %1048 = vmatprep.subr.bf16.mxu0 0
          %1049 = vmatpush1.bf16.msra.mxu0 %v1003
          %1050 = vmatprep.subr.bf16.mxu0 0
          %1051 = vmatpush1.bf16.msra.mxu0 %v1004
          %1052 = vmatprep.subr.bf16.mxu0 0
          %1053 = vmatpush1.bf16.msra.mxu0 %v1005
          %1054 = vmatprep.mubr.bf16.mxu0 %v882
          %1055 = vmatmul.mubr.bf16.gmra.mrb[0].mxu0 %v881
          %v1056 = vpop.f32.mrb[0].mxu0
          %v1057 = vadd.f32 %v924, %v1056
          %v1058 = vpop.f32.mrb[0].mxu0
          %v1059 = vpop.f32.mrb[0].mxu0
          %v1060 = vadd.f32 %v924, %v1059
          %v1061 = vpop.f32.mrb[0].mxu0
          %1062 = vdwg.mxu0
          %v1063 = vld [vmem:[#allocation3] sm:$0xff]
          %v1064 = vld [vmem:[#allocation3 + $0x8] sm:$0xff]
          %s1065 = smul.u32 %s33, 16
          %s1066 = scalar_lea.vmem [#allocation2], %s1065
          %v1067 = vld [vmem:[%s1066] sm:$0xff]
          %v1068 = vld [vmem:[%s1066 + $0x8] sm:$0xff]
          %1070 = vset.pattern.permute.xlu0 0
          %1071 = vperm.xlu0 %1070, %v1067
          %v1072 = vpop.permute.xlu0 %1071
          %1075 = vset.pattern.permute.xlu0 0
          %1076 = vperm.xlu0 %1075, %v1068
          %v1077 = vpop.permute.xlu0 %1076
          %v1079 = vmul.f32 %v1072, %v1057
          %v1080 = vmul.f32 %v1077, %v1060
          %v1081 = vadd.f32 %v1063, %v1079
          %v1082 = vadd.f32 %v1064, %v1080
          %1083 = vst [vmem:[#allocation3] sm:$0xff] %v1081
          %1084 = vst [vmem:[#allocation3 + $0x8] sm:$0xff] %v1082
        $region68: #{tpu_custom_call.1} parent=47 // pred_fallthru
          _
        %p1085 = scmp.eq.s32.totalorder %s33, 2
        %p1086 = pnand %p1085, %p457
        %p1087 = pneg %p1086
        // Predicated region
        $region69: #{tpu_custom_call.1} parent=47 // pred_check
          _
        $region70: #{tpu_custom_call.1} parent=47 // pred_check_branch
          %1089 = sbr.rel (%p1086) target = $region72
        $region71: #{tpu_custom_call.1} parent=47 // pred_region
          %v1090 = vld [vmem:[#allocation3] sm:$0xff]
          %v1091 = vld [vmem:[#allocation3 + $0x8] sm:$0xff]
          %1092 = vst [vmem:[#allocation11] sm:$0xff] %v1090
          %1093 = vst [vmem:[#allocation11 + $0x8] sm:$0xff] %v1091
        $region72: #{tpu_custom_call.1} parent=47 // pred_fallthru
          _
        // Predicated region
        $region73: #{tpu_custom_call.1} parent=47 // pred_check
          %p1094 = pneg %p247
        $region74: #{tpu_custom_call.1} parent=47 // pred_check_branch
          %1096 = sbr.rel (%p1094) target = $region76
        $region75: #{tpu_custom_call.1} parent=47 // pred_region
          %s1097 = smul.u32 2, %s32
          %s1099 = ssub.s32 256, 256
          %1100 = vsyncadd [#allocation8], %s1099
          %s1101 = smul.addr %s1097, 128
          %s1102 = scalar_lea.hbm %s8, %s1101
          %s1103 = sshll.u32 [#allocation11], 4
          %s1104 = int_to_ptr.vmem [resolvable:$true] %s1103
          %1109 = dma.vmem_to_hbm [thread:$0]  %s1104, 256, %s1102, [#allocation8], 128, 128, 8
        $region76: #{tpu_custom_call.1} parent=47 // pred_fallthru
          _
        // Predicated region
        $region77: #{tpu_custom_call.1} parent=47 // pred_check
          %p1110 = pneg %p247
        $region78: #{tpu_custom_call.1} parent=47 // pred_check_branch
          %1112 = sbr.rel (%p1110) target = $region80
        $region79: #{tpu_custom_call.1} parent=47 // pred_region
          %1113 = dma.done [#allocation8], 256
        $region80: #{tpu_custom_call.1} parent=47 // pred_fallthru
          _
      $region48: #{tpu_custom_call.1} parent=5 // pred_fallthru
        _
      %p1114 = scmp.le.s32.totalorder 2, %s22
      // Predicated region
      $region81: #{tpu_custom_call.1} parent=5 // pred_check
        %p1115 = pneg %p1114
      $region82: #{tpu_custom_call.1} parent=5 // pred_check_branch
        %1117 = sbr.rel (%p1115) target = $region84
      $region83: #{tpu_custom_call.1} parent=5 // pred_region
        %s1118 = ssub.s32 %s22, 2
      $region84: #{tpu_custom_call.1} parent=5 // pred_fallthru
        _
    $region6: #{tpu_custom_call.1} parent=1 // loop_footer
      %s26 = sadd.s32 1, %s22
    $region7: #{tpu_custom_call.1} parent=1 // loop_footer_branch
      %21 = sbr.rel target = $region3
    $region8: #{tpu_custom_call.1} parent=1 // loop_exit
      _
    %1119 = vsyncpa [#allocation7], 1
    %s1120 = scalar_lea.sflag [#allocation7], 1
    %1121 = vsyncpa %s1120, 1
    %1122 = vsyncpa [#allocation10], 1
    %s1123 = scalar_lea.sflag [#allocation10], 1
    %1124 = vsyncpa %s1123, 1
    %1125 = vsyncpa [#allocation8], 1
    %s1126 = scalar_lea.sflag [#allocation8], 1
    %1127 = vsyncpa %s1126, 1

</llo_original>
